<compile_context>
chip_gen: v7x
topology: tpu7x:2x2x1
jax: 0.10.0
libtpu: 0.0.40
codegen_flags: <defaults>
</compile_context>

<pallas_src>
import jax
import jax.numpy as jnp
from jax.experimental import pallas as pl
from jax.experimental.pallas import tpu as pltpu

EPS = 1e-5  # PyTorch BatchNorm2d default eps


# --------------------------------------------------------------------------------------
# Pallas kernel (one image per grid step)
# --------------------------------------------------------------------------------------
def make_residual_kernel(Ho, Wo, Hp, Wp, Cin, Cout, stride, has_ds):
    s = stride
    HW = Ho * Wo

    def kernel(*refs):
        if has_ds:
            (x1_ref, w1_ref, t1_ref, w2_ref, t2_ref,
             wd_ref, td_ref, out_ref, pad_ref) = refs
        else:
            (x1_ref, w1_ref, t1_ref, w2_ref, t2_ref, out_ref, pad_ref) = refs

        # ---- conv1 (3x3, stride s) + bn1 + relu: 9 full-slab tap matmuls --------------
        # x1_ref[0] is the phase-decomposed, zero-padded NHWC image: tap (kh, kw) is a
        # contiguous (Ho, Wo, Cin) window -> no strided loads, no wrapper-side im2col.
        acc1 = jnp.zeros((HW, Cout), jnp.float32)
        center = None  # centre tap == input at the output positions (= the residual)
        for kh in range(3):
            for kw in range(3):
                base = ((kh % s) * s + (kw % s)) * Hp
                tap = x1_ref[0, pl.ds(base + kh // s, Ho), pl.ds(kw // s, Wo), :]
                tap = tap.reshape(HW, Cin)
                if kh == 1 and kw == 1:
                    center = tap                      # keep f32 for an exact residual
                acc1 = acc1 + jnp.dot(tap.astype(jnp.bfloat16), w1_ref[kh * 3 + kw],
                                      preferred_element_type=jnp.float32)
        a1 = jnp.maximum(acc1 + t1_ref[...], 0.0)      # BN scale pre-folded into w1

        # ---- residual branch: reuse the centre tap (no separate input stream) ---------
        if has_ds:
            # 1x1 conv, stride s: the centre tap IS x at the output positions.
            r = jnp.dot(center.astype(jnp.bfloat16), wd_ref[...],
                        preferred_element_type=jnp.float32) + td_ref[...]
        else:
            r = center                                 # identity (Cin == Cout, s == 1)

        # ---- stash relu(bn1(conv1)) into zero-halo scratch -----------------------------
        # Border-only zeroing (interior is fully overwritten below).  Re-done every
        # grid step so "parallel" batch sharding across TensorCores stays correct.
        zrow = jnp.zeros((1, Wo + 2, Cout), jnp.float32)
        zcol = jnp.zeros((Ho + 2, 1, Cout), jnp.float32)
        pad_ref[pl.ds(0, 1), :, :] = zrow
        pad_ref[pl.ds(Ho + 1, 1), :, :] = zrow
        pad_ref[:, pl.ds(0, 1), :] = zcol
        pad_ref[:, pl.ds(Wo + 1, 1), :] = zcol
        pad_ref[pl.ds(1, Ho), pl.ds(1, Wo), :] = a1.reshape(Ho, Wo, Cout)

        # ---- conv2 (3x3, stride 1, pad 1) + bn2: 9 full-slab tap matmuls ---------------
        acc2 = jnp.zeros((HW, Cout), jnp.float32)
        for kh in range(3):
            for kw in range(3):
                tap = pad_ref[pl.ds(kh, Ho), pl.ds(kw, Wo), :].reshape(HW, Cout)
                acc2 = acc2 + jnp.dot(tap.astype(jnp.bfloat16), w2_ref[kh * 3 + kw],
                                      preferred_element_type=jnp.float32)

        # ---- residual add + final relu: single lane-dense slab store -------------------
        out_ref[0] = jnp.maximum(acc2 + t2_ref[...] + r, 0.0)

    return kernel


# --------------------------------------------------------------------------------------
# Wrapper (glue: layout prep, BN folding into bf16 weights, BlockSpecs)
# --------------------------------------------------------------------------------------
def residual_forward(x_nchw, params, stride):
    x = jnp.transpose(x_nchw, (0, 2, 3, 1)).astype(jnp.float32)          # NHWC
    N, H, W, Cin = x.shape
    Cout = params["conv1_w"].shape[0]
    s = int(stride)
    Ho = (H - 1) // s + 1
    Wo = (W - 1) // s + 1
    has_ds = (Cin != Cout) or (s != 1)

    # ---- phase-decomposed, zero-padded conv1 input (pure permutation, 1x traffic) -----
    # x1[n, (ph*s+pw)*Hp + q, r, c] == x_pad[n, q*s + ph, r*s + pw, c]
    # so tap (kh, kw) of the strided conv is the contiguous window
    #   x1[n, ((kh%s)*s + kw%s)*Hp + kh//s : ... + Ho, kw//s : kw//s + Wo, :]
    # and the centre tap (1, 1) is exactly x at the output positions (the residual).
    Hp = Ho - 1 + (3 + s - 1) // s
    Wp = Wo - 1 + (3 + s - 1) // s
    xp = jnp.pad(x, ((0, 0), (1, s * Hp - H - 1), (1, s * Wp - W - 1), (0, 0)))
    x1 = (xp.reshape(N, Hp, s, Wp, s, Cin)
            .transpose(0, 2, 4, 1, 3, 5)
            .reshape(N, s * s * Hp, Wp, Cin))

    # ---- fold BatchNorm (eval mode) + conv bias: scale into bf16 weights, f32 shift ---
    def fold_bn(gamma, beta, mean, var, conv_bias):
        sc = (gamma / jnp.sqrt(var + EPS)).astype(jnp.float32)           # (Cout,)
        sh = (beta + (conv_bias - mean) * sc).astype(jnp.float32)        # (Cout,)
        return sc, sh

    sc1, sh1 = fold_bn(params["bn1_g"], params["bn1_b"], params["bn1_m"], params["bn1_v"],
                       params["conv1_b"])
    w1m = (jnp.transpose(params["conv1_w"], (2, 3, 1, 0))                # (3,3,Cin,Cout)
             .reshape(9, Cin, Cout).astype(jnp.float32) * sc1).astype(jnp.bfloat16)
    t1 = sh1.reshape(1, Cout)

    sc2, sh2 = fold_bn(params["bn2_g"], params["bn2_b"], params["bn2_m"], params["bn2_v"],
                       params["conv2_b"])
    w2m = (jnp.transpose(params["conv2_w"], (2, 3, 1, 0))
             .reshape(9, Cout, Cout).astype(jnp.float32) * sc2).astype(jnp.bfloat16)
    t2 = sh2.reshape(1, Cout)

    def rep_spec(shape):  # parameter broadcast: same block every grid step
        nd = len(shape)
        return pl.BlockSpec(shape, lambda n, _nd=nd: (0,) * _nd)

    in_arrays = [x1, w1m, t1, w2m, t2]
    in_specs = [pl.BlockSpec((1, s * s * Hp, Wp, Cin), lambda n: (n, 0, 0, 0)),
                rep_spec((9, Cin, Cout)), rep_spec((1, Cout)),
                rep_spec((9, Cout, Cout)), rep_spec((1, Cout))]

    if has_ds:
        scd, shd = fold_bn(params["bnd_g"], params["bnd_b"], params["bnd_m"],
                           params["bnd_v"], params["ds_b"])
        wdm = (jnp.transpose(params["ds_w"][:, :, 0, 0], (1, 0)).astype(jnp.float32)
               * scd).astype(jnp.bfloat16)
        td = shd.reshape(1, Cout)
        in_arrays += [wdm, td]
        in_specs += [rep_spec((Cin, Cout)), rep_spec((1, Cout))]

    # ---- VMEM budget: raise v5e's 16 MiB default, stay inside v7x's 64 MiB physical ---
    bytes_x1 = s * s * Hp * Wp * Cin * 4
    bytes_out = Ho * Wo * Cout * 4
    bytes_w = ((9 * Cin * Cout + 9 * Cout * Cout + (Cin * Cout if has_ds else 0)) * 2
               + (3 if has_ds else 2) * Cout * 4)
    bytes_pad = (Ho + 2) * (Wo + 2) * Cout * 4
    est = 2 * (bytes_x1 + bytes_out + bytes_w) + bytes_pad   # double-buffered streams
    vmem_limit = int(min(max(32 * 1024 * 1024, 2 * est), 60 * 1024 * 1024))

    out_slab = pl.pallas_call(
        make_residual_kernel(Ho, Wo, Hp, Wp, Cin, Cout, s, has_ds),
        out_shape=jax.ShapeDtypeStruct((N, Ho * Wo, Cout), jnp.float32),
        grid_spec=pltpu.PrefetchScalarGridSpec(
            num_scalar_prefetch=0,
            grid=(N,),
            in_specs=in_specs,
            out_specs=pl.BlockSpec((1, Ho * Wo, Cout), lambda n: (n, 0, 0)),
            scratch_shapes=[pltpu.VMEM((Ho + 2, Wo + 2, Cout), jnp.float32)],
        ),
        compiler_params=pltpu.CompilerParams(
            dimension_semantics=("parallel",),
            vmem_limit_bytes=vmem_limit),
    )(*in_arrays)

    return jnp.transpose(out_slab.reshape(N, Ho, Wo, Cout), (0, 3, 1, 2))  # NCHW


# --------------------------------------------------------------------------------------
# Deterministic parameter init (PyTorch layouts: conv OIHW, BN per-channel vectors)
# --------------------------------------------------------------------------------------
def init_params(key, cin, cout, has_ds):
    ks = jax.random.split(key, 18)

    def nrm(k, shape, scale=0.1):
        return scale * jax.random.normal(k, shape, jnp.float32)

    p = {
        "conv1_w": nrm(ks[0], (cout, cin, 3, 3)),
        "conv1_b": nrm(ks[1], (cout,), 0.05),
        "bn1_g": 1.0 + nrm(ks[2], (cout,)),
        "bn1_b": nrm(ks[3], (cout,)),
        "bn1_m": nrm(ks[4], (cout,), 0.05),
        "bn1_v": jax.random.uniform(ks[5], (cout,), jnp.float32, 0.5, 1.5),
        "conv2_w": nrm(ks[6], (cout, cout, 3, 3)),
        "conv2_b": nrm(ks[7], (cout,), 0.05),
        "bn2_g": 1.0 + nrm(ks[8], (cout,)),
        "bn2_b": nrm(ks[9], (cout,)),
        "bn2_m": nrm(ks[10], (cout,), 0.05),
        "bn2_v": jax.random.uniform(ks[11], (cout,), jnp.float32, 0.5, 1.5),
    }
    if has_ds:
        p.update({
            "ds_w": nrm(ks[12], (cout, cin, 1, 1)),
            "ds_b": nrm(ks[13], (cout,), 0.05),
            "bnd_g": 1.0 + nrm(ks[14], (cout,)),
            "bnd_b": nrm(ks[15], (cout,)),
            "bnd_m": nrm(ks[16], (cout,), 0.05),
            "bnd_v": jax.random.uniform(ks[17], (cout,), jnp.float32, 0.5, 1.5),
        })
    return p


# --------------------------------------------------------------------------------------
# Pure-JAX reference (mirrors the PyTorch forward, eval-mode BN) for a correctness check
# --------------------------------------------------------------------------------------
def reference_forward(x, p, stride):
    def conv(x, w, b, s, pad):
        y = jax.lax.conv_general_dilated(
            x, w, (s, s), [(pad, pad), (pad, pad)],
            dimension_numbers=("NCHW", "OIHW", "NCHW"),
            precision=jax.lax.Precision.HIGHEST)
        return y + b[None, :, None, None]

    def bn(x, g, b, m, v):
        return (x - m[None, :, None, None]) * (
            g[None, :, None, None] / jnp.sqrt(v[None, :, None, None] + EPS)
        ) + b[None, :, None, None]

    out = jnp.maximum(bn(conv(x, p["conv1_w"], p["conv1_b"], stride, 1),
                         p["bn1_g"], p["bn1_b"], p["bn1_m"], p["bn1_v"]), 0.0)
    out = bn(conv(out, p["conv2_w"], p["conv2_b"], 1, 1),
             p["bn2_g"], p["bn2_b"], p["bn2_m"], p["bn2_v"])
    if "ds_w" in p:
        resid = bn(conv(x, p["ds_w"], p["ds_b"], stride, 0),
                   p["bnd_g"], p["bnd_b"], p["bnd_m"], p["bnd_v"])
    else:
        resid = x
    return jnp.maximum(out + resid, 0.0)


if __name__ == "__main__":
    key = jax.random.PRNGKey(0)
    kx, kp1, kp2 = jax.random.split(key, 3)

    fwd = jax.jit(residual_forward, static_argnums=2)

    # Tolerance is looser than the pure-f32 version because matmul operands are bf16
    # (f32 accumulation); the identity residual stays exact f32.
    TOL = 2e-2

    # Config 1: downsample branch active (Cin != Cout, stride 2)
    N, Cin, Cout, H, W, stride = 2, 4, 8, 16, 16, 2
    x = jax.random.normal(kx, (N, Cin, H, W), jnp.float32)              # NCHW input
    params = init_params(kp1, Cin, Cout, has_ds=True)
    y = jax.block_until_ready(fwd(x, params, stride))
    y_ref = reference_forward(x, params, stride)
    assert y.shape == (N, Cout, H // stride, W // stride)
    assert float(jnp.max(jnp.abs(y - y_ref))) < TOL

    # Config 2: identity residual (Cin == Cout, stride 1)
    params2 = init_params(kp2, Cout, Cout, has_ds=False)
    x2 = jax.random.normal(kx, (N, Cout, H, W), jnp.float32)
    y2 = jax.block_until_ready(fwd(x2, params2, 1))
    y2_ref = reference_forward(x2, params2, 1)
    assert y2.shape == (N, Cout, H, W)
    assert float(jnp.max(jnp.abs(y2 - y2_ref))) < TOL

    print("KERNEL_OK")
</pallas_src>

<mosaic_0001>
module attributes {stable_mosaic.version = 11 : i64} {
  func.func @kernel(%arg0: i32, %arg1: memref<1x36x9x4xf32, #tpu.memory_space<vmem>>, %arg2: memref<9x4x8xbf16, #tpu.memory_space<vmem>>, %arg3: memref<1x8xf32, #tpu.memory_space<vmem>>, %arg4: memref<9x8x8xbf16, #tpu.memory_space<vmem>>, %arg5: memref<1x8xf32, #tpu.memory_space<vmem>>, %arg6: memref<4x8xbf16, #tpu.memory_space<vmem>>, %arg7: memref<1x8xf32, #tpu.memory_space<vmem>>, %arg8: memref<1x64x8xf32, #tpu.memory_space<vmem>>, %arg9: memref<10x10x8xf32, #tpu.memory_space<vmem>>) attributes {dimension_semantics = [#tpu.dimension_semantics<parallel>], iteration_bounds = array<i64: 2>, scalar_prefetch = 0 : i64, scratch_operands = 1 : i64, tpu.core_type = #tpu.core_type<tc>, window_params = [{transform_indices = @transform_0, window_bounds = array<i64: 1, 36, 9, 4>}, {pipeline_mode = #tpu.pipeline_mode<synchronous>, transform_indices = @transform_1, window_bounds = array<i64: 9, 4, 8>}, {pipeline_mode = #tpu.pipeline_mode<synchronous>, transform_indices = @transform_2, window_bounds = array<i64: 1, 8>}, {pipeline_mode = #tpu.pipeline_mode<synchronous>, transform_indices = @transform_3, window_bounds = array<i64: 9, 8, 8>}, {pipeline_mode = #tpu.pipeline_mode<synchronous>, transform_indices = @transform_4, window_bounds = array<i64: 1, 8>}, {pipeline_mode = #tpu.pipeline_mode<synchronous>, transform_indices = @transform_5, window_bounds = array<i64: 4, 8>}, {pipeline_mode = #tpu.pipeline_mode<synchronous>, transform_indices = @transform_6, window_bounds = array<i64: 1, 8>}, {transform_indices = @transform_7, window_bounds = array<i64: 1, 64, 8>}]} {
    %cst = arith.constant 0.000000e+00 : f32
    %0 = vector.broadcast %cst : f32 to vector<64x8xf32>
    %c0 = arith.constant 0 : index
    %c0_0 = arith.constant 0 : index
    %c0_1 = arith.constant 0 : index
    %c0_2 = arith.constant 0 : index
    %1 = vector.load %arg1[%c0, %c0_0, %c0_1, %c0_2] : memref<1x36x9x4xf32, #tpu.memory_space<vmem>>, vector<1x8x8x4xf32>
    %2 = vector.shape_cast %1 : vector<1x8x8x4xf32> to vector<8x8x4xf32>
    %3 = vector.shape_cast %2 : vector<8x8x4xf32> to vector<64x4xf32>
    %4 = arith.truncf %3 : vector<64x4xf32> to vector<64x4xbf16>
    %c0_3 = arith.constant 0 : index
    %c0_4 = arith.constant 0 : index
    %c0_5 = arith.constant 0 : index
    %5 = vector.load %arg2[%c0_3, %c0_4, %c0_5] : memref<9x4x8xbf16, #tpu.memory_space<vmem>>, vector<1x4x8xbf16>
    %6 = vector.shape_cast %5 : vector<1x4x8xbf16> to vector<4x8xbf16>
    %cst_6 = arith.constant dense<0.000000e+00> : vector<64x8xf32>
    %7 = tpu.matmul %4, %6, %cst_6 {dimension_numbers = #tpu.dot_dimension_numbers<[1], [0], [0], [1], [0, 0, 1, 1], [], []>} : vector<64x4xbf16>, vector<4x8xbf16>, vector<64x8xf32> -> vector<64x8xf32>
    %8 = arith.addf %0, %7 : vector<64x8xf32>
    %c0_7 = arith.constant 0 : index
    %c9 = arith.constant 9 : index
    %c0_8 = arith.constant 0 : index
    %c0_9 = arith.constant 0 : index
    %9 = vector.load %arg1[%c0_7, %c9, %c0_8, %c0_9] : memref<1x36x9x4xf32, #tpu.memory_space<vmem>>, vector<1x8x8x4xf32>
    %10 = vector.shape_cast %9 : vector<1x8x8x4xf32> to vector<8x8x4xf32>
    %11 = vector.shape_cast %10 : vector<8x8x4xf32> to vector<64x4xf32>
    %12 = arith.truncf %11 : vector<64x4xf32> to vector<64x4xbf16>
    %c1 = arith.constant 1 : index
    %c0_10 = arith.constant 0 : index
    %c0_11 = arith.constant 0 : index
    %13 = vector.load %arg2[%c1, %c0_10, %c0_11] : memref<9x4x8xbf16, #tpu.memory_space<vmem>>, vector<1x4x8xbf16>
    %14 = vector.shape_cast %13 : vector<1x4x8xbf16> to vector<4x8xbf16>
    %cst_12 = arith.constant dense<0.000000e+00> : vector<64x8xf32>
    %15 = tpu.matmul %12, %14, %cst_12 {dimension_numbers = #tpu.dot_dimension_numbers<[1], [0], [0], [1], [0, 0, 1, 1], [], []>} : vector<64x4xbf16>, vector<4x8xbf16>, vector<64x8xf32> -> vector<64x8xf32>
    %16 = arith.addf %8, %15 : vector<64x8xf32>
    %c0_13 = arith.constant 0 : index
    %c0_14 = arith.constant 0 : index
    %c1_15 = arith.constant 1 : index
    %c0_16 = arith.constant 0 : index
    %17 = vector.load %arg1[%c0_13, %c0_14, %c1_15, %c0_16] : memref<1x36x9x4xf32, #tpu.memory_space<vmem>>, vector<1x8x8x4xf32>
    %18 = vector.shape_cast %17 : vector<1x8x8x4xf32> to vector<8x8x4xf32>
    %19 = vector.shape_cast %18 : vector<8x8x4xf32> to vector<64x4xf32>
    %20 = arith.truncf %19 : vector<64x4xf32> to vector<64x4xbf16>
    %c2 = arith.constant 2 : index
    %c0_17 = arith.constant 0 : index
    %c0_18 = arith.constant 0 : index
    %21 = vector.load %arg2[%c2, %c0_17, %c0_18] : memref<9x4x8xbf16, #tpu.memory_space<vmem>>, vector<1x4x8xbf16>
    %22 = vector.shape_cast %21 : vector<1x4x8xbf16> to vector<4x8xbf16>
    %cst_19 = arith.constant dense<0.000000e+00> : vector<64x8xf32>
    %23 = tpu.matmul %20, %22, %cst_19 {dimension_numbers = #tpu.dot_dimension_numbers<[1], [0], [0], [1], [0, 0, 1, 1], [], []>} : vector<64x4xbf16>, vector<4x8xbf16>, vector<64x8xf32> -> vector<64x8xf32>
    %24 = arith.addf %16, %23 : vector<64x8xf32>
    %c0_20 = arith.constant 0 : index
    %c18 = arith.constant 18 : index
    %c0_21 = arith.constant 0 : index
    %c0_22 = arith.constant 0 : index
    %25 = vector.load %arg1[%c0_20, %c18, %c0_21, %c0_22] : memref<1x36x9x4xf32, #tpu.memory_space<vmem>>, vector<1x8x8x4xf32>
    %26 = vector.shape_cast %25 : vector<1x8x8x4xf32> to vector<8x8x4xf32>
    %27 = vector.shape_cast %26 : vector<8x8x4xf32> to vector<64x4xf32>
    %28 = arith.truncf %27 : vector<64x4xf32> to vector<64x4xbf16>
    %c3 = arith.constant 3 : index
    %c0_23 = arith.constant 0 : index
    %c0_24 = arith.constant 0 : index
    %29 = vector.load %arg2[%c3, %c0_23, %c0_24] : memref<9x4x8xbf16, #tpu.memory_space<vmem>>, vector<1x4x8xbf16>
    %30 = vector.shape_cast %29 : vector<1x4x8xbf16> to vector<4x8xbf16>
    %cst_25 = arith.constant dense<0.000000e+00> : vector<64x8xf32>
    %31 = tpu.matmul %28, %30, %cst_25 {dimension_numbers = #tpu.dot_dimension_numbers<[1], [0], [0], [1], [0, 0, 1, 1], [], []>} : vector<64x4xbf16>, vector<4x8xbf16>, vector<64x8xf32> -> vector<64x8xf32>
    %32 = arith.addf %24, %31 : vector<64x8xf32>
    %c0_26 = arith.constant 0 : index
    %c27 = arith.constant 27 : index
    %c0_27 = arith.constant 0 : index
    %c0_28 = arith.constant 0 : index
    %33 = vector.load %arg1[%c0_26, %c27, %c0_27, %c0_28] : memref<1x36x9x4xf32, #tpu.memory_space<vmem>>, vector<1x8x8x4xf32>
    %34 = vector.shape_cast %33 : vector<1x8x8x4xf32> to vector<8x8x4xf32>
    %35 = vector.shape_cast %34 : vector<8x8x4xf32> to vector<64x4xf32>
    %36 = arith.truncf %35 : vector<64x4xf32> to vector<64x4xbf16>
    %c4 = arith.constant 4 : index
    %c0_29 = arith.constant 0 : index
    %c0_30 = arith.constant 0 : index
    %37 = vector.load %arg2[%c4, %c0_29, %c0_30] : memref<9x4x8xbf16, #tpu.memory_space<vmem>>, vector<1x4x8xbf16>
    %38 = vector.shape_cast %37 : vector<1x4x8xbf16> to vector<4x8xbf16>
    %cst_31 = arith.constant dense<0.000000e+00> : vector<64x8xf32>
    %39 = tpu.matmul %36, %38, %cst_31 {dimension_numbers = #tpu.dot_dimension_numbers<[1], [0], [0], [1], [0, 0, 1, 1], [], []>} : vector<64x4xbf16>, vector<4x8xbf16>, vector<64x8xf32> -> vector<64x8xf32>
    %40 = arith.addf %32, %39 : vector<64x8xf32>
    %c0_32 = arith.constant 0 : index
    %c18_33 = arith.constant 18 : index
    %c1_34 = arith.constant 1 : index
    %c0_35 = arith.constant 0 : index
    %41 = vector.load %arg1[%c0_32, %c18_33, %c1_34, %c0_35] : memref<1x36x9x4xf32, #tpu.memory_space<vmem>>, vector<1x8x8x4xf32>
    %42 = vector.shape_cast %41 : vector<1x8x8x4xf32> to vector<8x8x4xf32>
    %43 = vector.shape_cast %42 : vector<8x8x4xf32> to vector<64x4xf32>
    %44 = arith.truncf %43 : vector<64x4xf32> to vector<64x4xbf16>
    %c5 = arith.constant 5 : index
    %c0_36 = arith.constant 0 : index
    %c0_37 = arith.constant 0 : index
    %45 = vector.load %arg2[%c5, %c0_36, %c0_37] : memref<9x4x8xbf16, #tpu.memory_space<vmem>>, vector<1x4x8xbf16>
    %46 = vector.shape_cast %45 : vector<1x4x8xbf16> to vector<4x8xbf16>
    %cst_38 = arith.constant dense<0.000000e+00> : vector<64x8xf32>
    %47 = tpu.matmul %44, %46, %cst_38 {dimension_numbers = #tpu.dot_dimension_numbers<[1], [0], [0], [1], [0, 0, 1, 1], [], []>} : vector<64x4xbf16>, vector<4x8xbf16>, vector<64x8xf32> -> vector<64x8xf32>
    %48 = arith.addf %40, %47 : vector<64x8xf32>
    %c0_39 = arith.constant 0 : index
    %c1_40 = arith.constant 1 : index
    %c0_41 = arith.constant 0 : index
    %c0_42 = arith.constant 0 : index
    %49 = vector.load %arg1[%c0_39, %c1_40, %c0_41, %c0_42] : memref<1x36x9x4xf32, #tpu.memory_space<vmem>>, vector<1x8x8x4xf32>
    %50 = vector.shape_cast %49 : vector<1x8x8x4xf32> to vector<8x8x4xf32>
    %51 = vector.shape_cast %50 : vector<8x8x4xf32> to vector<64x4xf32>
    %52 = arith.truncf %51 : vector<64x4xf32> to vector<64x4xbf16>
    %c6 = arith.constant 6 : index
    %c0_43 = arith.constant 0 : index
    %c0_44 = arith.constant 0 : index
    %53 = vector.load %arg2[%c6, %c0_43, %c0_44] : memref<9x4x8xbf16, #tpu.memory_space<vmem>>, vector<1x4x8xbf16>
    %54 = vector.shape_cast %53 : vector<1x4x8xbf16> to vector<4x8xbf16>
    %cst_45 = arith.constant dense<0.000000e+00> : vector<64x8xf32>
    %55 = tpu.matmul %52, %54, %cst_45 {dimension_numbers = #tpu.dot_dimension_numbers<[1], [0], [0], [1], [0, 0, 1, 1], [], []>} : vector<64x4xbf16>, vector<4x8xbf16>, vector<64x8xf32> -> vector<64x8xf32>
    %56 = arith.addf %48, %55 : vector<64x8xf32>
    %c0_46 = arith.constant 0 : index
    %c10 = arith.constant 10 : index
    %c0_47 = arith.constant 0 : index
    %c0_48 = arith.constant 0 : index
    %57 = vector.load %arg1[%c0_46, %c10, %c0_47, %c0_48] : memref<1x36x9x4xf32, #tpu.memory_space<vmem>>, vector<1x8x8x4xf32>
    %58 = vector.shape_cast %57 : vector<1x8x8x4xf32> to vector<8x8x4xf32>
    %59 = vector.shape_cast %58 : vector<8x8x4xf32> to vector<64x4xf32>
    %60 = arith.truncf %59 : vector<64x4xf32> to vector<64x4xbf16>
    %c7 = arith.constant 7 : index
    %c0_49 = arith.constant 0 : index
    %c0_50 = arith.constant 0 : index
    %61 = vector.load %arg2[%c7, %c0_49, %c0_50] : memref<9x4x8xbf16, #tpu.memory_space<vmem>>, vector<1x4x8xbf16>
    %62 = vector.shape_cast %61 : vector<1x4x8xbf16> to vector<4x8xbf16>
    %cst_51 = arith.constant dense<0.000000e+00> : vector<64x8xf32>
    %63 = tpu.matmul %60, %62, %cst_51 {dimension_numbers = #tpu.dot_dimension_numbers<[1], [0], [0], [1], [0, 0, 1, 1], [], []>} : vector<64x4xbf16>, vector<4x8xbf16>, vector<64x8xf32> -> vector<64x8xf32>
    %64 = arith.addf %56, %63 : vector<64x8xf32>
    %c0_52 = arith.constant 0 : index
    %c1_53 = arith.constant 1 : index
    %c1_54 = arith.constant 1 : index
    %c0_55 = arith.constant 0 : index
    %65 = vector.load %arg1[%c0_52, %c1_53, %c1_54, %c0_55] : memref<1x36x9x4xf32, #tpu.memory_space<vmem>>, vector<1x8x8x4xf32>
    %66 = vector.shape_cast %65 : vector<1x8x8x4xf32> to vector<8x8x4xf32>
    %67 = vector.shape_cast %66 : vector<8x8x4xf32> to vector<64x4xf32>
    %68 = arith.truncf %67 : vector<64x4xf32> to vector<64x4xbf16>
    %c8 = arith.constant 8 : index
    %c0_56 = arith.constant 0 : index
    %c0_57 = arith.constant 0 : index
    %69 = vector.load %arg2[%c8, %c0_56, %c0_57] : memref<9x4x8xbf16, #tpu.memory_space<vmem>>, vector<1x4x8xbf16>
    %70 = vector.shape_cast %69 : vector<1x4x8xbf16> to vector<4x8xbf16>
    %cst_58 = arith.constant dense<0.000000e+00> : vector<64x8xf32>
    %71 = tpu.matmul %68, %70, %cst_58 {dimension_numbers = #tpu.dot_dimension_numbers<[1], [0], [0], [1], [0, 0, 1, 1], [], []>} : vector<64x4xbf16>, vector<4x8xbf16>, vector<64x8xf32> -> vector<64x8xf32>
    %72 = arith.addf %64, %71 : vector<64x8xf32>
    %c0_59 = arith.constant 0 : index
    %c0_60 = arith.constant 0 : index
    %73 = vector.load %arg3[%c0_59, %c0_60] : memref<1x8xf32, #tpu.memory_space<vmem>>, vector<1x8xf32>
    %74 = vector.broadcast %73 : vector<1x8xf32> to vector<64x8xf32>
    %75 = arith.addf %72, %74 : vector<64x8xf32>
    %cst_61 = arith.constant 0.000000e+00 : f32
    %76 = vector.broadcast %cst_61 : f32 to vector<64x8xf32>
    %77 = arith.maximumf %75, %76 : vector<64x8xf32>
    %78 = arith.truncf %35 : vector<64x4xf32> to vector<64x4xbf16>
    %c0_62 = arith.constant 0 : index
    %c0_63 = arith.constant 0 : index
    %79 = vector.load %arg6[%c0_62, %c0_63] : memref<4x8xbf16, #tpu.memory_space<vmem>>, vector<4x8xbf16>
    %cst_64 = arith.constant dense<0.000000e+00> : vector<64x8xf32>
    %80 = tpu.matmul %78, %79, %cst_64 {dimension_numbers = #tpu.dot_dimension_numbers<[1], [0], [0], [1], [0, 0, 1, 1], [], []>} : vector<64x4xbf16>, vector<4x8xbf16>, vector<64x8xf32> -> vector<64x8xf32>
    %c0_65 = arith.constant 0 : index
    %c0_66 = arith.constant 0 : index
    %81 = vector.load %arg7[%c0_65, %c0_66] : memref<1x8xf32, #tpu.memory_space<vmem>>, vector<1x8xf32>
    %82 = vector.broadcast %81 : vector<1x8xf32> to vector<64x8xf32>
    %83 = arith.addf %80, %82 : vector<64x8xf32>
    %cst_67 = arith.constant 0.000000e+00 : f32
    %84 = vector.broadcast %cst_67 : f32 to vector<1x10x8xf32>
    %cst_68 = arith.constant 0.000000e+00 : f32
    %85 = vector.broadcast %cst_68 : f32 to vector<10x1x8xf32>
    %c0_69 = arith.constant 0 : index
    %c0_70 = arith.constant 0 : index
    %c0_71 = arith.constant 0 : index
    %86 = vector.load %arg9[%c0_69, %c0_70, %c0_71] : memref<10x10x8xf32, #tpu.memory_space<vmem>>, vector<1x10x8xf32>
    tpu.vector_store %arg9[%c0_69, %c0_70, %c0_71], %84 {strides = array<i32>} : memref<10x10x8xf32, #tpu.memory_space<vmem>>, vector<1x10x8xf32>,
    %c9_72 = arith.constant 9 : index
    %c0_73 = arith.constant 0 : index
    %c0_74 = arith.constant 0 : index
    %87 = vector.load %arg9[%c9_72, %c0_73, %c0_74] : memref<10x10x8xf32, #tpu.memory_space<vmem>>, vector<1x10x8xf32>
    tpu.vector_store %arg9[%c9_72, %c0_73, %c0_74], %84 {strides = array<i32>} : memref<10x10x8xf32, #tpu.memory_space<vmem>>, vector<1x10x8xf32>,
    %c0_75 = arith.constant 0 : index
    %c0_76 = arith.constant 0 : index
    %c0_77 = arith.constant 0 : index
    %88 = vector.load %arg9[%c0_75, %c0_76, %c0_77] : memref<10x10x8xf32, #tpu.memory_space<vmem>>, vector<10x1x8xf32>
    tpu.vector_store %arg9[%c0_75, %c0_76, %c0_77], %85 {strides = array<i32>} : memref<10x10x8xf32, #tpu.memory_space<vmem>>, vector<10x1x8xf32>,
    %c0_78 = arith.constant 0 : index
    %c9_79 = arith.constant 9 : index
    %c0_80 = arith.constant 0 : index
    %89 = vector.load %arg9[%c0_78, %c9_79, %c0_80] : memref<10x10x8xf32, #tpu.memory_space<vmem>>, vector<10x1x8xf32>
    tpu.vector_store %arg9[%c0_78, %c9_79, %c0_80], %85 {strides = array<i32>} : memref<10x10x8xf32, #tpu.memory_space<vmem>>, vector<10x1x8xf32>,
    %90 = vector.shape_cast %77 : vector<64x8xf32> to vector<8x8x8xf32>
    %c1_81 = arith.constant 1 : index
    %c1_82 = arith.constant 1 : index
    %c0_83 = arith.constant 0 : index
    %91 = vector.load %arg9[%c1_81, %c1_82, %c0_83] : memref<10x10x8xf32, #tpu.memory_space<vmem>>, vector<8x8x8xf32>
    tpu.vector_store %arg9[%c1_81, %c1_82, %c0_83], %90 {strides = array<i32>} : memref<10x10x8xf32, #tpu.memory_space<vmem>>, vector<8x8x8xf32>,
    %cst_84 = arith.constant 0.000000e+00 : f32
    %92 = vector.broadcast %cst_84 : f32 to vector<64x8xf32>
    %c0_85 = arith.constant 0 : index
    %c0_86 = arith.constant 0 : index
    %c0_87 = arith.constant 0 : index
    %93 = vector.load %arg9[%c0_85, %c0_86, %c0_87] : memref<10x10x8xf32, #tpu.memory_space<vmem>>, vector<8x8x8xf32>
    %94 = vector.shape_cast %93 : vector<8x8x8xf32> to vector<64x8xf32>
    %95 = arith.truncf %94 : vector<64x8xf32> to vector<64x8xbf16>
    %c0_88 = arith.constant 0 : index
    %c0_89 = arith.constant 0 : index
    %c0_90 = arith.constant 0 : index
    %96 = vector.load %arg4[%c0_88, %c0_89, %c0_90] : memref<9x8x8xbf16, #tpu.memory_space<vmem>>, vector<1x8x8xbf16>
    %97 = vector.shape_cast %96 : vector<1x8x8xbf16> to vector<8x8xbf16>
    %cst_91 = arith.constant dense<0.000000e+00> : vector<64x8xf32>
    %98 = tpu.matmul %95, %97, %cst_91 {dimension_numbers = #tpu.dot_dimension_numbers<[1], [0], [0], [1], [0, 0, 1, 1], [], []>} : vector<64x8xbf16>, vector<8x8xbf16>, vector<64x8xf32> -> vector<64x8xf32>
    %99 = arith.addf %92, %98 : vector<64x8xf32>
    %c0_92 = arith.constant 0 : index
    %c1_93 = arith.constant 1 : index
    %c0_94 = arith.constant 0 : index
    %100 = vector.load %arg9[%c0_92, %c1_93, %c0_94] : memref<10x10x8xf32, #tpu.memory_space<vmem>>, vector<8x8x8xf32>
    %101 = vector.shape_cast %100 : vector<8x8x8xf32> to vector<64x8xf32>
    %102 = arith.truncf %101 : vector<64x8xf32> to vector<64x8xbf16>
    %c1_95 = arith.constant 1 : index
    %c0_96 = arith.constant 0 : index
    %c0_97 = arith.constant 0 : index
    %103 = vector.load %arg4[%c1_95, %c0_96, %c0_97] : memref<9x8x8xbf16, #tpu.memory_space<vmem>>, vector<1x8x8xbf16>
    %104 = vector.shape_cast %103 : vector<1x8x8xbf16> to vector<8x8xbf16>
    %cst_98 = arith.constant dense<0.000000e+00> : vector<64x8xf32>
    %105 = tpu.matmul %102, %104, %cst_98 {dimension_numbers = #tpu.dot_dimension_numbers<[1], [0], [0], [1], [0, 0, 1, 1], [], []>} : vector<64x8xbf16>, vector<8x8xbf16>, vector<64x8xf32> -> vector<64x8xf32>
    %106 = arith.addf %99, %105 : vector<64x8xf32>
    %c0_99 = arith.constant 0 : index
    %c2_100 = arith.constant 2 : index
    %c0_101 = arith.constant 0 : index
    %107 = vector.load %arg9[%c0_99, %c2_100, %c0_101] : memref<10x10x8xf32, #tpu.memory_space<vmem>>, vector<8x8x8xf32>
    %108 = vector.shape_cast %107 : vector<8x8x8xf32> to vector<64x8xf32>
    %109 = arith.truncf %108 : vector<64x8xf32> to vector<64x8xbf16>
    %c2_102 = arith.constant 2 : index
    %c0_103 = arith.constant 0 : index
    %c0_104 = arith.constant 0 : index
    %110 = vector.load %arg4[%c2_102, %c0_103, %c0_104] : memref<9x8x8xbf16, #tpu.memory_space<vmem>>, vector<1x8x8xbf16>
    %111 = vector.shape_cast %110 : vector<1x8x8xbf16> to vector<8x8xbf16>
    %cst_105 = arith.constant dense<0.000000e+00> : vector<64x8xf32>
    %112 = tpu.matmul %109, %111, %cst_105 {dimension_numbers = #tpu.dot_dimension_numbers<[1], [0], [0], [1], [0, 0, 1, 1], [], []>} : vector<64x8xbf16>, vector<8x8xbf16>, vector<64x8xf32> -> vector<64x8xf32>
    %113 = arith.addf %106, %112 : vector<64x8xf32>
    %c1_106 = arith.constant 1 : index
    %c0_107 = arith.constant 0 : index
    %c0_108 = arith.constant 0 : index
    %114 = vector.load %arg9[%c1_106, %c0_107, %c0_108] : memref<10x10x8xf32, #tpu.memory_space<vmem>>, vector<8x8x8xf32>
    %115 = vector.shape_cast %114 : vector<8x8x8xf32> to vector<64x8xf32>
    %116 = arith.truncf %115 : vector<64x8xf32> to vector<64x8xbf16>
    %c3_109 = arith.constant 3 : index
    %c0_110 = arith.constant 0 : index
    %c0_111 = arith.constant 0 : index
    %117 = vector.load %arg4[%c3_109, %c0_110, %c0_111] : memref<9x8x8xbf16, #tpu.memory_space<vmem>>, vector<1x8x8xbf16>
    %118 = vector.shape_cast %117 : vector<1x8x8xbf16> to vector<8x8xbf16>
    %cst_112 = arith.constant dense<0.000000e+00> : vector<64x8xf32>
    %119 = tpu.matmul %116, %118, %cst_112 {dimension_numbers = #tpu.dot_dimension_numbers<[1], [0], [0], [1], [0, 0, 1, 1], [], []>} : vector<64x8xbf16>, vector<8x8xbf16>, vector<64x8xf32> -> vector<64x8xf32>
    %120 = arith.addf %113, %119 : vector<64x8xf32>
    %c1_113 = arith.constant 1 : index
    %c1_114 = arith.constant 1 : index
    %c0_115 = arith.constant 0 : index
    %121 = vector.load %arg9[%c1_113, %c1_114, %c0_115] : memref<10x10x8xf32, #tpu.memory_space<vmem>>, vector<8x8x8xf32>
    %122 = vector.shape_cast %121 : vector<8x8x8xf32> to vector<64x8xf32>
    %123 = arith.truncf %122 : vector<64x8xf32> to vector<64x8xbf16>
    %c4_116 = arith.constant 4 : index
    %c0_117 = arith.constant 0 : index
    %c0_118 = arith.constant 0 : index
    %124 = vector.load %arg4[%c4_116, %c0_117, %c0_118] : memref<9x8x8xbf16, #tpu.memory_space<vmem>>, vector<1x8x8xbf16>
    %125 = vector.shape_cast %124 : vector<1x8x8xbf16> to vector<8x8xbf16>
    %cst_119 = arith.constant dense<0.000000e+00> : vector<64x8xf32>
    %126 = tpu.matmul %123, %125, %cst_119 {dimension_numbers = #tpu.dot_dimension_numbers<[1], [0], [0], [1], [0, 0, 1, 1], [], []>} : vector<64x8xbf16>, vector<8x8xbf16>, vector<64x8xf32> -> vector<64x8xf32>
    %127 = arith.addf %120, %126 : vector<64x8xf32>
    %c1_120 = arith.constant 1 : index
    %c2_121 = arith.constant 2 : index
    %c0_122 = arith.constant 0 : index
    %128 = vector.load %arg9[%c1_120, %c2_121, %c0_122] : memref<10x10x8xf32, #tpu.memory_space<vmem>>, vector<8x8x8xf32>
    %129 = vector.shape_cast %128 : vector<8x8x8xf32> to vector<64x8xf32>
    %130 = arith.truncf %129 : vector<64x8xf32> to vector<64x8xbf16>
    %c5_123 = arith.constant 5 : index
    %c0_124 = arith.constant 0 : index
    %c0_125 = arith.constant 0 : index
    %131 = vector.load %arg4[%c5_123, %c0_124, %c0_125] : memref<9x8x8xbf16, #tpu.memory_space<vmem>>, vector<1x8x8xbf16>
    %132 = vector.shape_cast %131 : vector<1x8x8xbf16> to vector<8x8xbf16>
    %cst_126 = arith.constant dense<0.000000e+00> : vector<64x8xf32>
    %133 = tpu.matmul %130, %132, %cst_126 {dimension_numbers = #tpu.dot_dimension_numbers<[1], [0], [0], [1], [0, 0, 1, 1], [], []>} : vector<64x8xbf16>, vector<8x8xbf16>, vector<64x8xf32> -> vector<64x8xf32>
    %134 = arith.addf %127, %133 : vector<64x8xf32>
    %c2_127 = arith.constant 2 : index
    %c0_128 = arith.constant 0 : index
    %c0_129 = arith.constant 0 : index
    %135 = vector.load %arg9[%c2_127, %c0_128, %c0_129] : memref<10x10x8xf32, #tpu.memory_space<vmem>>, vector<8x8x8xf32>
    %136 = vector.shape_cast %135 : vector<8x8x8xf32> to vector<64x8xf32>
    %137 = arith.truncf %136 : vector<64x8xf32> to vector<64x8xbf16>
    %c6_130 = arith.constant 6 : index
    %c0_131 = arith.constant 0 : index
    %c0_132 = arith.constant 0 : index
    %138 = vector.load %arg4[%c6_130, %c0_131, %c0_132] : memref<9x8x8xbf16, #tpu.memory_space<vmem>>, vector<1x8x8xbf16>
    %139 = vector.shape_cast %138 : vector<1x8x8xbf16> to vector<8x8xbf16>
    %cst_133 = arith.constant dense<0.000000e+00> : vector<64x8xf32>
    %140 = tpu.matmul %137, %139, %cst_133 {dimension_numbers = #tpu.dot_dimension_numbers<[1], [0], [0], [1], [0, 0, 1, 1], [], []>} : vector<64x8xbf16>, vector<8x8xbf16>, vector<64x8xf32> -> vector<64x8xf32>
    %141 = arith.addf %134, %140 : vector<64x8xf32>
    %c2_134 = arith.constant 2 : index
    %c1_135 = arith.constant 1 : index
    %c0_136 = arith.constant 0 : index
    %142 = vector.load %arg9[%c2_134, %c1_135, %c0_136] : memref<10x10x8xf32, #tpu.memory_space<vmem>>, vector<8x8x8xf32>
    %143 = vector.shape_cast %142 : vector<8x8x8xf32> to vector<64x8xf32>
    %144 = arith.truncf %143 : vector<64x8xf32> to vector<64x8xbf16>
    %c7_137 = arith.constant 7 : index
    %c0_138 = arith.constant 0 : index
    %c0_139 = arith.constant 0 : index
    %145 = vector.load %arg4[%c7_137, %c0_138, %c0_139] : memref<9x8x8xbf16, #tpu.memory_space<vmem>>, vector<1x8x8xbf16>
    %146 = vector.shape_cast %145 : vector<1x8x8xbf16> to vector<8x8xbf16>
    %cst_140 = arith.constant dense<0.000000e+00> : vector<64x8xf32>
    %147 = tpu.matmul %144, %146, %cst_140 {dimension_numbers = #tpu.dot_dimension_numbers<[1], [0], [0], [1], [0, 0, 1, 1], [], []>} : vector<64x8xbf16>, vector<8x8xbf16>, vector<64x8xf32> -> vector<64x8xf32>
    %148 = arith.addf %141, %147 : vector<64x8xf32>
    %c2_141 = arith.constant 2 : index
    %c2_142 = arith.constant 2 : index
    %c0_143 = arith.constant 0 : index
    %149 = vector.load %arg9[%c2_141, %c2_142, %c0_143] : memref<10x10x8xf32, #tpu.memory_space<vmem>>, vector<8x8x8xf32>
    %150 = vector.shape_cast %149 : vector<8x8x8xf32> to vector<64x8xf32>
    %151 = arith.truncf %150 : vector<64x8xf32> to vector<64x8xbf16>
    %c8_144 = arith.constant 8 : index
    %c0_145 = arith.constant 0 : index
    %c0_146 = arith.constant 0 : index
    %152 = vector.load %arg4[%c8_144, %c0_145, %c0_146] : memref<9x8x8xbf16, #tpu.memory_space<vmem>>, vector<1x8x8xbf16>
    %153 = vector.shape_cast %152 : vector<1x8x8xbf16> to vector<8x8xbf16>
    %cst_147 = arith.constant dense<0.000000e+00> : vector<64x8xf32>
    %154 = tpu.matmul %151, %153, %cst_147 {dimension_numbers = #tpu.dot_dimension_numbers<[1], [0], [0], [1], [0, 0, 1, 1], [], []>} : vector<64x8xbf16>, vector<8x8xbf16>, vector<64x8xf32> -> vector<64x8xf32>
    %155 = arith.addf %148, %154 : vector<64x8xf32>
    %c0_148 = arith.constant 0 : index
    %c0_149 = arith.constant 0 : index
    %156 = vector.load %arg5[%c0_148, %c0_149] : memref<1x8xf32, #tpu.memory_space<vmem>>, vector<1x8xf32>
    %157 = vector.broadcast %156 : vector<1x8xf32> to vector<64x8xf32>
    %158 = arith.addf %155, %157 : vector<64x8xf32>
    %159 = arith.addf %158, %83 : vector<64x8xf32>
    %cst_150 = arith.constant 0.000000e+00 : f32
    %160 = vector.broadcast %cst_150 : f32 to vector<64x8xf32>
    %161 = arith.maximumf %159, %160 : vector<64x8xf32>
    %c0_151 = arith.constant 0 : index
    %c0_152 = arith.constant 0 : index
    %c0_153 = arith.constant 0 : index
    %162 = vector.load %arg8[%c0_151, %c0_152, %c0_153] : memref<1x64x8xf32, #tpu.memory_space<vmem>>, vector<1x64x8xf32>
    %163 = vector.shape_cast %162 : vector<1x64x8xf32> to vector<64x8xf32>
    %164 = vector.shape_cast %161 : vector<64x8xf32> to vector<1x64x8xf32>
    tpu.vector_store %arg8[%c0_151, %c0_152, %c0_153], %164 {strides = array<i32>} : memref<1x64x8xf32, #tpu.memory_space<vmem>>, vector<1x64x8xf32>,
    return
  }
  func.func @transform_0(%arg0: i32) -> (i32, i32, i32, i32) {
    %c0_i32 = arith.constant 0 : i32
    %c0_i32_0 = arith.constant 0 : i32
    %c0_i32_1 = arith.constant 0 : i32
    %c0_i32_2 = arith.constant 0 : i32
    return %arg0, %c0_i32, %c0_i32_0, %c0_i32_1 : i32, i32, i32, i32
  }
  func.func @transform_1(%arg0: i32) -> (i32, i32, i32) {
    %c0_i32 = arith.constant 0 : i32
    %c0_i32_0 = arith.constant 0 : i32
    %c0_i32_1 = arith.constant 0 : i32
    %c0_i32_2 = arith.constant 0 : i32
    return %c0_i32, %c0_i32_0, %c0_i32_1 : i32, i32, i32
  }
  func.func @transform_2(%arg0: i32) -> (i32, i32) {
    %c0_i32 = arith.constant 0 : i32
    %c0_i32_0 = arith.constant 0 : i32
    %c0_i32_1 = arith.constant 0 : i32
    return %c0_i32, %c0_i32_0 : i32, i32
  }
  func.func @transform_3(%arg0: i32) -> (i32, i32, i32) {
    %c0_i32 = arith.constant 0 : i32
    %c0_i32_0 = arith.constant 0 : i32
    %c0_i32_1 = arith.constant 0 : i32
    %c0_i32_2 = arith.constant 0 : i32
    return %c0_i32, %c0_i32_0, %c0_i32_1 : i32, i32, i32
  }
  func.func @transform_4(%arg0: i32) -> (i32, i32) {
    %c0_i32 = arith.constant 0 : i32
    %c0_i32_0 = arith.constant 0 : i32
    %c0_i32_1 = arith.constant 0 : i32
    return %c0_i32, %c0_i32_0 : i32, i32
  }
  func.func @transform_5(%arg0: i32) -> (i32, i32) {
    %c0_i32 = arith.constant 0 : i32
    %c0_i32_0 = arith.constant 0 : i32
    %c0_i32_1 = arith.constant 0 : i32
    return %c0_i32, %c0_i32_0 : i32, i32
  }
  func.func @transform_6(%arg0: i32) -> (i32, i32) {
    %c0_i32 = arith.constant 0 : i32
    %c0_i32_0 = arith.constant 0 : i32
    %c0_i32_1 = arith.constant 0 : i32
    return %c0_i32, %c0_i32_0 : i32, i32
  }
  func.func @transform_7(%arg0: i32) -> (i32, i32, i32) {
    %c0_i32 = arith.constant 0 : i32
    %c0_i32_0 = arith.constant 0 : i32
    %c0_i32_1 = arith.constant 0 : i32
    return %arg0, %c0_i32, %c0_i32_0 : i32, i32, i32
  }
}

</mosaic_0001>

<llo_original>
// kernel: residual_forward.1
$region0: #{residual_forward.1}
  #allocation0 [shape = 'u32[]', space=smem, size = 0x4, offset = 0x4, fixed_abs, tag = 'smem constant byte address 0x4 - core index']
  #allocation1 [shape = 'u32[144,128]{1,0:T(1,128)}', space=vmem, size = 0x12000, scoped, tag = 'internal scratch']
  #allocation2 [shape = 'f32[10,10,8]{2,1,0:T(8,128)}', space=vmem, size = 0x14000, scoped, tag = 'scratch operand']
  %s0 = inlined_call_operand.vmem [shape: f32[2,36,9,4], index: 0, kind: input, shape index: {}]
  %s1 = inlined_call_operand.vmem [shape: bf16[9,4,8], index: 1, kind: input, shape index: {}]
  %s2 = inlined_call_operand.vmem [shape: f32[1,8], index: 2, kind: input, shape index: {}]
  %s3 = inlined_call_operand.vmem [shape: bf16[9,8,8], index: 3, kind: input, shape index: {}]
  %s4 = inlined_call_operand.vmem [shape: f32[1,8], index: 4, kind: input, shape index: {}]
  %s5 = inlined_call_operand.vmem [shape: bf16[4,8], index: 5, kind: input, shape index: {}]
  %s6 = inlined_call_operand.vmem [shape: f32[1,8], index: 6, kind: input, shape index: {}]
  %s7 = inlined_call_operand.vmem [shape: f32[2,64,8], index: 7, kind: output, shape index: {}]
  %s8 = sld [smem:[#allocation0]]
  $region61: #{residual_forward.1} parent=0
    _
  %s10 = ssub.s32 1, %s8
  %s11 = scalar_select 0, %s10, %s8
  loop: start=0, step=1, limit=4
  $region2: #{residual_forward.1} parent=0 // loop_pre_header
    _
  $region3: #{residual_forward.1} parent=0 // loop_header
    %s13 = sphi 0, %s17
    %p14 = scmp.ge.s32.totalorder %s13, 4
    %s23 = sphi 0, %s25
    %s26 = sphi 0, %s23
    %s27 = sphi 0, %s26
    %s43 = sphi 0, %s27
    %s47 = sphi 0, %s47
    %s49 = sphi 0, %s47
    %s50 = sphi 0, %s49
    %s64 = sphi 0, %s50
    %s68 = sphi 0, %s68
    %s70 = sphi 0, %s68
    %s71 = sphi 0, %s70
    %s85 = sphi 0, %s71
    %s89 = sphi 0, %s89
    %s91 = sphi 0, %s89
    %s92 = sphi 0, %s91
    %s106 = sphi 0, %s92
    %s110 = sphi 0, %s110
    %s112 = sphi 0, %s110
    %s113 = sphi 0, %s112
    %s127 = sphi 0, %s113
    %s131 = sphi 0, %s131
    %s133 = sphi 0, %s131
    %s134 = sphi 0, %s133
    %s148 = sphi 0, %s134
    %s152 = sphi 0, %s152
    %s154 = sphi 0, %s152
    %s155 = sphi 0, %s154
    %s169 = sphi 0, %s155
    %s175 = sphi 0, %s177
    %s178 = sphi 0, %s175
    %s179 = sphi 0, %s178
    %s195 = sphi 0, %s179
  $region4: #{residual_forward.1} parent=0 // loop_header_branch
    %16 = sbr.rel (%p14) target = $region8
  $region5: #{residual_forward.1} parent=0 // loop_body
    %s18 = ssub.s32 %s13, 1
    %s19 = ssub.s32 %s13, 2
    %s20 = sadd.s32 %s13, 1
    %s21 = ssub.s32 %s13, %s20
    %p22 = scmp.eq.s32.totalorder %s21, 0
    %s24 = sadd.s32 %s23, 1
    %s25 = scalar_select %p22, %s23, %s24
    %p28 = pneg %p22
    %p29 = scmp.eq.s32.totalorder %s13, 1
    %p30 = por %p28, %p29
    %p31 = scmp.ne.s32.totalorder %s23, %s26
    %p32 = scmp.eq.s32.totalorder %s13, 0
    %p33 = por %p31, %p32
    %p34 = scmp.ne.s32.totalorder %s23, %s26
    %p35 = scmp.eq.s32.totalorder %s18, 1
    %p36 = por %p34, %p35
    %p37 = scmp.ne.s32.totalorder %s26, %s27
    %p38 = scmp.eq.s32.totalorder %s18, 0
    %p39 = por %p37, %p38
    %p40 = scmp.ne.s32.totalorder %s26, %s27
    %p41 = scmp.eq.s32.totalorder %s19, 1
    %p42 = por %p40, %p41
    %p44 = scmp.ne.s32.totalorder %s27, %s43
    %p45 = scmp.eq.s32.totalorder %s19, 0
    %p46 = por %p44, %p45
    %s48 = sadd.s32 %s47, 1
    %p51 = scmp.eq.s32.totalorder %s13, 1
    %p52 = scmp.ne.s32.totalorder %s47, %s49
    %p53 = scmp.eq.s32.totalorder %s13, 0
    %p54 = por %p52, %p53
    %p55 = scmp.ne.s32.totalorder %s47, %s49
    %p56 = scmp.eq.s32.totalorder %s18, 1
    %p57 = por %p55, %p56
    %p58 = scmp.ne.s32.totalorder %s49, %s50
    %p59 = scmp.eq.s32.totalorder %s18, 0
    %p60 = por %p58, %p59
    %p61 = scmp.ne.s32.totalorder %s49, %s50
    %p62 = scmp.eq.s32.totalorder %s19, 1
    %p63 = por %p61, %p62
    %p65 = scmp.ne.s32.totalorder %s50, %s64
    %p66 = scmp.eq.s32.totalorder %s19, 0
    %p67 = por %p65, %p66
    %s69 = sadd.s32 %s68, 1
    %p72 = scmp.eq.s32.totalorder %s13, 1
    %p73 = scmp.ne.s32.totalorder %s68, %s70
    %p74 = scmp.eq.s32.totalorder %s13, 0
    %p75 = por %p73, %p74
    %p76 = scmp.ne.s32.totalorder %s68, %s70
    %p77 = scmp.eq.s32.totalorder %s18, 1
    %p78 = por %p76, %p77
    %p79 = scmp.ne.s32.totalorder %s70, %s71
    %p80 = scmp.eq.s32.totalorder %s18, 0
    %p81 = por %p79, %p80
    %p82 = scmp.ne.s32.totalorder %s70, %s71
    %p83 = scmp.eq.s32.totalorder %s19, 1
    %p84 = por %p82, %p83
    %p86 = scmp.ne.s32.totalorder %s71, %s85
    %p87 = scmp.eq.s32.totalorder %s19, 0
    %p88 = por %p86, %p87
    %s90 = sadd.s32 %s89, 1
    %p93 = scmp.eq.s32.totalorder %s13, 1
    %p94 = scmp.ne.s32.totalorder %s89, %s91
    %p95 = scmp.eq.s32.totalorder %s13, 0
    %p96 = por %p94, %p95
    %p97 = scmp.ne.s32.totalorder %s89, %s91
    %p98 = scmp.eq.s32.totalorder %s18, 1
    %p99 = por %p97, %p98
    %p100 = scmp.ne.s32.totalorder %s91, %s92
    %p101 = scmp.eq.s32.totalorder %s18, 0
    %p102 = por %p100, %p101
    %p103 = scmp.ne.s32.totalorder %s91, %s92
    %p104 = scmp.eq.s32.totalorder %s19, 1
    %p105 = por %p103, %p104
    %p107 = scmp.ne.s32.totalorder %s92, %s106
    %p108 = scmp.eq.s32.totalorder %s19, 0
    %p109 = por %p107, %p108
    %s111 = sadd.s32 %s110, 1
    %p114 = scmp.eq.s32.totalorder %s13, 1
    %p115 = scmp.ne.s32.totalorder %s110, %s112
    %p116 = scmp.eq.s32.totalorder %s13, 0
    %p117 = por %p115, %p116
    %p118 = scmp.ne.s32.totalorder %s110, %s112
    %p119 = scmp.eq.s32.totalorder %s18, 1
    %p120 = por %p118, %p119
    %p121 = scmp.ne.s32.totalorder %s112, %s113
    %p122 = scmp.eq.s32.totalorder %s18, 0
    %p123 = por %p121, %p122
    %p124 = scmp.ne.s32.totalorder %s112, %s113
    %p125 = scmp.eq.s32.totalorder %s19, 1
    %p126 = por %p124, %p125
    %p128 = scmp.ne.s32.totalorder %s113, %s127
    %p129 = scmp.eq.s32.totalorder %s19, 0
    %p130 = por %p128, %p129
    %s132 = sadd.s32 %s131, 1
    %p135 = scmp.eq.s32.totalorder %s13, 1
    %p136 = scmp.ne.s32.totalorder %s131, %s133
    %p137 = scmp.eq.s32.totalorder %s13, 0
    %p138 = por %p136, %p137
    %p139 = scmp.ne.s32.totalorder %s131, %s133
    %p140 = scmp.eq.s32.totalorder %s18, 1
    %p141 = por %p139, %p140
    %p142 = scmp.ne.s32.totalorder %s133, %s134
    %p143 = scmp.eq.s32.totalorder %s18, 0
    %p144 = por %p142, %p143
    %p145 = scmp.ne.s32.totalorder %s133, %s134
    %p146 = scmp.eq.s32.totalorder %s19, 1
    %p147 = por %p145, %p146
    %p149 = scmp.ne.s32.totalorder %s134, %s148
    %p150 = scmp.eq.s32.totalorder %s19, 0
    %p151 = por %p149, %p150
    %s153 = sadd.s32 %s152, 1
    %p156 = scmp.eq.s32.totalorder %s13, 1
    %p157 = scmp.ne.s32.totalorder %s152, %s154
    %p158 = scmp.eq.s32.totalorder %s13, 0
    %p159 = por %p157, %p158
    %p160 = scmp.ne.s32.totalorder %s152, %s154
    %p161 = scmp.eq.s32.totalorder %s18, 1
    %p162 = por %p160, %p161
    %p163 = scmp.ne.s32.totalorder %s154, %s155
    %p164 = scmp.eq.s32.totalorder %s18, 0
    %p165 = por %p163, %p164
    %p166 = scmp.ne.s32.totalorder %s154, %s155
    %p167 = scmp.eq.s32.totalorder %s19, 1
    %p168 = por %p166, %p167
    %p170 = scmp.ne.s32.totalorder %s155, %s169
    %p171 = scmp.eq.s32.totalorder %s19, 0
    %p172 = por %p170, %p171
    %s173 = ssub.s32 %s13, %s20
    %p174 = scmp.eq.s32.totalorder %s173, 0
    %s176 = sadd.s32 %s175, 1
    %s177 = scalar_select %p174, %s175, %s176
    %p180 = pneg %p174
    %p181 = scmp.eq.s32.totalorder %s13, 1
    %p182 = por %p180, %p181
    %p183 = scmp.ne.s32.totalorder %s175, %s178
    %p184 = scmp.eq.s32.totalorder %s13, 0
    %p185 = por %p183, %p184
    %p186 = scmp.ne.s32.totalorder %s175, %s178
    %p187 = scmp.eq.s32.totalorder %s18, 1
    %p188 = por %p186, %p187
    %p189 = scmp.ne.s32.totalorder %s178, %s179
    %p190 = scmp.eq.s32.totalorder %s18, 0
    %p191 = por %p189, %p190
    %p192 = scmp.ne.s32.totalorder %s178, %s179
    %p193 = scmp.eq.s32.totalorder %s19, 1
    %p194 = por %p192, %p193
    %p196 = scmp.ne.s32.totalorder %s179, %s195
    %p197 = scmp.eq.s32.totalorder %s19, 0
    %p198 = por %p196, %p197
    %p199 = scmp.le.s32.totalorder 1, %s13
    %p200 = scmp.lt.s32.totalorder %s13, 3
    %p201 = pnand %p199, %p200
    %p202 = pneg %p201
    // Predicated region
    $region9: #{residual_forward.1} parent=5 // pred_check
      _
    $region10: #{residual_forward.1} parent=5 // pred_check_branch
      %204 = sbr.rel (%p201) target = $region12
    $region11: #{residual_forward.1} parent=5 // pred_region
      %s205 = ssub.s32 %s13, 1
      // Predicated region
      $region13: #{residual_forward.1} parent=11 // pred_check
        %p206 = pneg %p60
      $region14: #{residual_forward.1} parent=11 // pred_check_branch
        %208 = sbr.rel (%p206) target = $region16
      $region15: #{residual_forward.1} parent=11 // pred_region
        _
      $region16: #{residual_forward.1} parent=11 // pred_fallthru
        _
      // Predicated region
      $region17: #{residual_forward.1} parent=11 // pred_check
        %p209 = pneg %p81
      $region18: #{residual_forward.1} parent=11 // pred_check_branch
        %211 = sbr.rel (%p209) target = $region20
      $region19: #{residual_forward.1} parent=11 // pred_region
        _
      $region20: #{residual_forward.1} parent=11 // pred_fallthru
        _
      // Predicated region
      $region21: #{residual_forward.1} parent=11 // pred_check
        %p212 = pneg %p102
      $region22: #{residual_forward.1} parent=11 // pred_check_branch
        %214 = sbr.rel (%p212) target = $region24
      $region23: #{residual_forward.1} parent=11 // pred_region
        _
      $region24: #{residual_forward.1} parent=11 // pred_fallthru
        _
      // Predicated region
      $region25: #{residual_forward.1} parent=11 // pred_check
        %p215 = pneg %p123
      $region26: #{residual_forward.1} parent=11 // pred_check_branch
        %217 = sbr.rel (%p215) target = $region28
      $region27: #{residual_forward.1} parent=11 // pred_region
        _
      $region28: #{residual_forward.1} parent=11 // pred_fallthru
        _
      // Predicated region
      $region29: #{residual_forward.1} parent=11 // pred_check
        %p218 = pneg %p144
      $region30: #{residual_forward.1} parent=11 // pred_check_branch
        %220 = sbr.rel (%p218) target = $region32
      $region31: #{residual_forward.1} parent=11 // pred_region
        _
      $region32: #{residual_forward.1} parent=11 // pred_fallthru
        _
      // Predicated region
      $region33: #{residual_forward.1} parent=11 // pred_check
        %p221 = pneg %p165
      $region34: #{residual_forward.1} parent=11 // pred_check_branch
        %223 = sbr.rel (%p221) target = $region36
      $region35: #{residual_forward.1} parent=11 // pred_region
        _
      $region36: #{residual_forward.1} parent=11 // pred_fallthru
        _
    $region12: #{residual_forward.1} parent=5 // pred_fallthru
      _
    %p224 = scmp.lt.s32.totalorder %s13, 2
    // Predicated region
    $region37: #{residual_forward.1} parent=5 // pred_check
      %p225 = pneg %p224
    $region38: #{residual_forward.1} parent=5 // pred_check_branch
      %227 = sbr.rel (%p225) target = $region40
    $region39: #{residual_forward.1} parent=5 // pred_region
      // Predicated region
      $region41: #{residual_forward.1} parent=39 // pred_check
        %p228 = pneg %p33
      $region42: #{residual_forward.1} parent=39 // pred_check_branch
        %230 = sbr.rel (%p228) target = $region44
      $region43: #{residual_forward.1} parent=39 // pred_region
        %p231 = scmp.lt.s32.totalorder %s13, 1
        %s232 = scalar_select %p231, %s13, 1
        %s233 = smul.addr %s232, 72
        %s234 = smul.addr %s233, 8
        %s235 = scalar_lea.vmem %s0, %s234
      $region44: #{residual_forward.1} parent=39 // pred_fallthru
        _
    $region40: #{residual_forward.1} parent=5 // pred_fallthru
      _
    %p236 = scmp.le.s32.totalorder 1, %s13
    %p237 = scmp.lt.s32.totalorder %s13, 3
    %p238 = pnand %p236, %p237
    %p239 = pneg %p238
    // Predicated region
    $region45: #{residual_forward.1} parent=5 // pred_check
      _
    $region46: #{residual_forward.1} parent=5 // pred_check_branch
      %241 = sbr.rel (%p238) target = $region48
    $region47: #{residual_forward.1} parent=5 // pred_region
      %s242 = ssub.s32 %s13, 1
      %p243 = scmp.lt.s32.totalorder %s18, 1
      %s244 = scalar_select %p243, %s18, 1
      %s245 = smul.addr %s244, 72
      %s246 = smul.addr %s245, 8
      %s247 = scalar_lea.vmem %s0, %s246
      %p248 = pneg %p39
      %p249 = pneg %p36
      %p250 = pneg %p60
      %p251 = pneg %p57
      %p252 = pneg %p81
      %p253 = pneg %p78
      %p254 = pneg %p102
      %p255 = pneg %p99
      %p256 = pneg %p123
      %p257 = pneg %p120
      %p258 = pneg %p144
      %p259 = pneg %p141
      %p260 = pneg %p165
      %p261 = pneg %p162
      %p262 = pneg %p191
      %p263 = pneg %p188
      %p264 = scmp.lt.s32.totalorder %s18, 1
      %s265 = scalar_select %p264, %s18, 1
      %s266 = smul.addr %s265, 8
      %s267 = smul.addr %s266, 8
      %s268 = scalar_lea.vmem %s7, %s267
      %p269 = scmp.lt.s32.totalorder %s18, 1
      %s270 = scalar_select %p269, %s18, 1
      %s271 = smul.addr %s270, 72
      %s272 = smul.addr %s271, 8
      %s273 = scalar_lea.vmem %s0, %s272
      %p274 = scmp.lt.s32.totalorder %s18, 1
      %s275 = scalar_select %p274, %s18, 1
      %s276 = smul.addr %s275, 8
      %s277 = smul.addr %s276, 8
      %s278 = scalar_lea.vmem %s7, %s277
      %v280 = vld [vmem:[%s273] sm:$0xff]
      %v281 = vld [vmem:[%s273 + $0x10] sm:$0xff]
      %v282 = vld [vmem:[%s273 + $0x20] sm:$0xff]
      %v283 = vld [vmem:[%s273 + $0x30] sm:$0xff]
      %v284 = vld [vmem:[%s273 + $0x40] sm:$0xff]
      %v285 = vld [vmem:[%s273 + $0x50] sm:$0xff]
      %v286 = vld [vmem:[%s273 + $0x60] sm:$0xff]
      %v287 = vld [vmem:[%s273 + $0x70] sm:$0xff]
      %v288 = vpack.c.bf16 %v281, %v280
      %v289 = vpack.c.bf16 %v283, %v282
      %v290 = vpack.c.bf16 %v285, %v284
      %v291 = vpack.c.bf16 %v287, %v286
      %v292 = vld [vmem:[%s1] sm:$0x3]
      %s293 = scalar_lea.vmem %s273, 144
      %v294 = vld [vmem:[%s293] sm:$0xff]
      %v295 = vld [vmem:[%s293 + $0x10] sm:$0xff]
      %v296 = vld [vmem:[%s293 + $0x20] sm:$0xff]
      %v297 = vld [vmem:[%s293 + $0x30] sm:$0xff]
      %v298 = vld [vmem:[%s293 + $0x40] sm:$0xff]
      %v299 = vld [vmem:[%s293 + $0x50] sm:$0xff]
      %v300 = vld [vmem:[%s293 + $0x60] sm:$0xff]
      %v301 = vld [vmem:[%s293 + $0x70] sm:$0xff]
      %v302 = vpack.c.bf16 %v295, %v294
      %v303 = vpack.c.bf16 %v297, %v296
      %v304 = vpack.c.bf16 %v299, %v298
      %v305 = vpack.c.bf16 %v301, %v300
      %s306 = scalar_lea.vmem %s1, 2
      %v307 = vld [vmem:[%s306] sm:$0x3]
      %vm308 = vcmask 31744
      %v310 = vsel %vm308, %v302, 0
      %v313 = vsel %vm308, %v303, 0
      %v316 = vsel %vm308, %v304, 0
      %v319 = vsel %vm308, %v305, 0
      %vm321 = vcmask 1041408
      %v323 = vsel %vm321, %v307, 0
      %325 = vmatprep.subr.bf16.mxu0 0
      %326 = vmatpush1.bf16.msra.mxu0 %v323
      %327 = vmatprep.subr.bf16.mxu0 0
      %328 = vmatpush1.bf16.msra.mxu0 0
      %329 = vmatprep.subr.bf16.mxu0 0
      %330 = vmatpush1.bf16.msra.mxu0 0
      %331 = vmatprep.subr.bf16.mxu0 0
      %332 = vmatpush1.bf16.msra.mxu0 0
      %333 = vmatprep.subr.bf16.mxu0 0
      %334 = vmatpush1.bf16.msra.mxu0 0
      %335 = vmatprep.subr.bf16.mxu0 0
      %336 = vmatpush1.bf16.msra.mxu0 0
      %337 = vmatprep.subr.bf16.mxu0 0
      %338 = vmatpush1.bf16.msra.mxu0 0
      %339 = vmatprep.subr.bf16.mxu0 0
      %340 = vmatpush1.bf16.msra.mxu0 0
      %341 = vmatprep.subr.bf16.mxu0 0
      %342 = vmatpush1.bf16.msra.mxu0 0
      %343 = vmatprep.subr.bf16.mxu0 0
      %344 = vmatpush1.bf16.msra.mxu0 0
      %345 = vmatprep.subr.bf16.mxu0 0
      %346 = vmatpush1.bf16.msra.mxu0 0
      %347 = vmatprep.subr.bf16.mxu0 0
      %348 = vmatpush1.bf16.msra.mxu0 0
      %349 = vmatprep.subr.bf16.mxu0 0
      %350 = vmatpush1.bf16.msra.mxu0 0
      %351 = vmatprep.subr.bf16.mxu0 0
      %352 = vmatpush1.bf16.msra.mxu0 0
      %353 = vmatprep.subr.bf16.mxu0 0
      %354 = vmatpush1.bf16.msra.mxu0 0
      %355 = vmatprep.subr.bf16.mxu0 0
      %356 = vmatpush1.bf16.msra.mxu0 0
      %357 = vmatprep.mubr.bf16.mxu0 0
      %358 = vmatmul.mubr.bf16.gmra.mrb[0].mxu0 %v310
      %v359 = vpop.f32.mrb[0].mxu0
      %v360 = vadd.f32 0.0, %v359
      %v361 = vpop.f32.mrb[0].mxu0
      %v362 = vpop.f32.mrb[0].mxu0
      %v363 = vadd.f32 0.0, %v362
      %v364 = vpop.f32.mrb[0].mxu0
      %365 = vmatprep.mubr.bf16.mxu0 0
      %366 = vmatmul.mubr.bf16.gmra.mrb[0].mxu0 %v313
      %v367 = vpop.f32.mrb[0].mxu0
      %v368 = vadd.f32 0.0, %v367
      %v369 = vpop.f32.mrb[0].mxu0
      %v370 = vpop.f32.mrb[0].mxu0
      %v371 = vadd.f32 0.0, %v370
      %v372 = vpop.f32.mrb[0].mxu0
      %373 = vmatprep.mubr.bf16.mxu0 0
      %374 = vmatmul.mubr.bf16.gmra.mrb[0].mxu0 %v316
      %v375 = vpop.f32.mrb[0].mxu0
      %v376 = vadd.f32 0.0, %v375
      %v377 = vpop.f32.mrb[0].mxu0
      %v378 = vpop.f32.mrb[0].mxu0
      %v379 = vadd.f32 0.0, %v378
      %v380 = vpop.f32.mrb[0].mxu0
      %381 = vmatprep.mubr.bf16.mxu0 0
      %382 = vmatmul.mubr.bf16.gmra.mrb[0].mxu0 %v319
      %v383 = vpop.f32.mrb[0].mxu0
      %v384 = vadd.f32 0.0, %v383
      %v385 = vpop.f32.mrb[0].mxu0
      %v386 = vpop.f32.mrb[0].mxu0
      %v387 = vadd.f32 0.0, %v386
      %v388 = vpop.f32.mrb[0].mxu0
      %389 = vdwg.mxu0
      %v391 = vsel %vm308, %v288, 0
      %v394 = vsel %vm308, %v289, 0
      %v397 = vsel %vm308, %v290, 0
      %v400 = vsel %vm308, %v291, 0
      %v403 = vsel %vm321, %v292, 0
      %405 = vmatprep.subr.bf16.mxu0 0
      %406 = vmatpush1.bf16.msra.mxu0 %v403
      %407 = vmatprep.subr.bf16.mxu0 0
      %408 = vmatpush1.bf16.msra.mxu0 0
      %409 = vmatprep.subr.bf16.mxu0 0
      %410 = vmatpush1.bf16.msra.mxu0 0
      %411 = vmatprep.subr.bf16.mxu0 0
      %412 = vmatpush1.bf16.msra.mxu0 0
      %413 = vmatprep.subr.bf16.mxu0 0
      %414 = vmatpush1.bf16.msra.mxu0 0
      %415 = vmatprep.subr.bf16.mxu0 0
      %416 = vmatpush1.bf16.msra.mxu0 0
      %417 = vmatprep.subr.bf16.mxu0 0
      %418 = vmatpush1.bf16.msra.mxu0 0
      %419 = vmatprep.subr.bf16.mxu0 0
      %420 = vmatpush1.bf16.msra.mxu0 0
      %421 = vmatprep.subr.bf16.mxu0 0
      %422 = vmatpush1.bf16.msra.mxu0 0
      %423 = vmatprep.subr.bf16.mxu0 0
      %424 = vmatpush1.bf16.msra.mxu0 0
      %425 = vmatprep.subr.bf16.mxu0 0
      %426 = vmatpush1.bf16.msra.mxu0 0
      %427 = vmatprep.subr.bf16.mxu0 0
      %428 = vmatpush1.bf16.msra.mxu0 0
      %429 = vmatprep.subr.bf16.mxu0 0
      %430 = vmatpush1.bf16.msra.mxu0 0
      %431 = vmatprep.subr.bf16.mxu0 0
      %432 = vmatpush1.bf16.msra.mxu0 0
      %433 = vmatprep.subr.bf16.mxu0 0
      %434 = vmatpush1.bf16.msra.mxu0 0
      %435 = vmatprep.subr.bf16.mxu0 0
      %436 = vmatpush1.bf16.msra.mxu0 0
      %437 = vmatprep.mubr.bf16.mxu0 0
      %438 = vmatmul.mubr.bf16.gmra.mrb[0].mxu0 %v391
      %v439 = vpop.f32.mrb[0].mxu0
      %v440 = vadd.f32 %v360, %v439
      %v441 = vpop.f32.mrb[0].mxu0
      %v442 = vpop.f32.mrb[0].mxu0
      %v443 = vadd.f32 %v363, %v442
      %v444 = vpop.f32.mrb[0].mxu0
      %445 = vmatprep.mubr.bf16.mxu0 0
      %446 = vmatmul.mubr.bf16.gmra.mrb[0].mxu0 %v394
      %v447 = vpop.f32.mrb[0].mxu0
      %v448 = vadd.f32 %v368, %v447
      %v449 = vpop.f32.mrb[0].mxu0
      %v450 = vpop.f32.mrb[0].mxu0
      %v451 = vadd.f32 %v371, %v450
      %v452 = vpop.f32.mrb[0].mxu0
      %453 = vmatprep.mubr.bf16.mxu0 0
      %454 = vmatmul.mubr.bf16.gmra.mrb[0].mxu0 %v397
      %v455 = vpop.f32.mrb[0].mxu0
      %v456 = vadd.f32 %v376, %v455
      %v457 = vpop.f32.mrb[0].mxu0
      %v458 = vpop.f32.mrb[0].mxu0
      %v459 = vadd.f32 %v379, %v458
      %v460 = vpop.f32.mrb[0].mxu0
      %461 = vmatprep.mubr.bf16.mxu0 0
      %462 = vmatmul.mubr.bf16.gmra.mrb[0].mxu0 %v400
      %v463 = vpop.f32.mrb[0].mxu0
      %v464 = vadd.f32 %v384, %v463
      %v465 = vpop.f32.mrb[0].mxu0
      %v466 = vpop.f32.mrb[0].mxu0
      %v467 = vadd.f32 %v387, %v466
      %v468 = vpop.f32.mrb[0].mxu0
      %469 = vdwg.mxu0
      %v470 = vld [vmem:[%s273 + $0x1] sm:$0xff]
      %v471 = vld [vmem:[%s273 + $0x11] sm:$0xff]
      %v472 = vld [vmem:[%s273 + $0x21] sm:$0xff]
      %v473 = vld [vmem:[%s273 + $0x31] sm:$0xff]
      %v474 = vld [vmem:[%s273 + $0x41] sm:$0xff]
      %v475 = vld [vmem:[%s273 + $0x51] sm:$0xff]
      %v476 = vld [vmem:[%s273 + $0x61] sm:$0xff]
      %v477 = vld [vmem:[%s273 + $0x71] sm:$0xff]
      %v478 = vpack.c.bf16 %v471, %v470
      %v479 = vpack.c.bf16 %v473, %v472
      %v480 = vpack.c.bf16 %v475, %v474
      %v481 = vpack.c.bf16 %v477, %v476
      %s482 = scalar_lea.vmem %s1, 4
      %v483 = vld [vmem:[%s482] sm:$0x3]
      %v485 = vsel %vm308, %v478, 0
      %v488 = vsel %vm308, %v479, 0
      %v491 = vsel %vm308, %v480, 0
      %v494 = vsel %vm308, %v481, 0
      %v497 = vsel %vm321, %v483, 0
      %499 = vmatprep.subr.bf16.mxu0 0
      %500 = vmatpush1.bf16.msra.mxu0 %v497
      %501 = vmatprep.subr.bf16.mxu0 0
      %502 = vmatpush1.bf16.msra.mxu0 0
      %503 = vmatprep.subr.bf16.mxu0 0
      %504 = vmatpush1.bf16.msra.mxu0 0
      %505 = vmatprep.subr.bf16.mxu0 0
      %506 = vmatpush1.bf16.msra.mxu0 0
      %507 = vmatprep.subr.bf16.mxu0 0
      %508 = vmatpush1.bf16.msra.mxu0 0
      %509 = vmatprep.subr.bf16.mxu0 0
      %510 = vmatpush1.bf16.msra.mxu0 0
      %511 = vmatprep.subr.bf16.mxu0 0
      %512 = vmatpush1.bf16.msra.mxu0 0
      %513 = vmatprep.subr.bf16.mxu0 0
      %514 = vmatpush1.bf16.msra.mxu0 0
      %515 = vmatprep.subr.bf16.mxu0 0
      %516 = vmatpush1.bf16.msra.mxu0 0
      %517 = vmatprep.subr.bf16.mxu0 0
      %518 = vmatpush1.bf16.msra.mxu0 0
      %519 = vmatprep.subr.bf16.mxu0 0
      %520 = vmatpush1.bf16.msra.mxu0 0
      %521 = vmatprep.subr.bf16.mxu0 0
      %522 = vmatpush1.bf16.msra.mxu0 0
      %523 = vmatprep.subr.bf16.mxu0 0
      %524 = vmatpush1.bf16.msra.mxu0 0
      %525 = vmatprep.subr.bf16.mxu0 0
      %526 = vmatpush1.bf16.msra.mxu0 0
      %527 = vmatprep.subr.bf16.mxu0 0
      %528 = vmatpush1.bf16.msra.mxu0 0
      %529 = vmatprep.subr.bf16.mxu0 0
      %530 = vmatpush1.bf16.msra.mxu0 0
      %531 = vmatprep.mubr.bf16.mxu0 0
      %532 = vmatmul.mubr.bf16.gmra.mrb[0].mxu0 %v485
      %v533 = vpop.f32.mrb[0].mxu0
      %v534 = vadd.f32 0.0, %v533
      %v535 = vpop.f32.mrb[0].mxu0
      %v536 = vpop.f32.mrb[0].mxu0
      %v537 = vadd.f32 0.0, %v536
      %v538 = vpop.f32.mrb[0].mxu0
      %539 = vmatprep.mubr.bf16.mxu0 0
      %540 = vmatmul.mubr.bf16.gmra.mrb[0].mxu0 %v488
      %v541 = vpop.f32.mrb[0].mxu0
      %v542 = vadd.f32 0.0, %v541
      %v543 = vpop.f32.mrb[0].mxu0
      %v544 = vpop.f32.mrb[0].mxu0
      %v545 = vadd.f32 0.0, %v544
      %v546 = vpop.f32.mrb[0].mxu0
      %547 = vmatprep.mubr.bf16.mxu0 0
      %548 = vmatmul.mubr.bf16.gmra.mrb[0].mxu0 %v491
      %v549 = vpop.f32.mrb[0].mxu0
      %v550 = vadd.f32 0.0, %v549
      %v551 = vpop.f32.mrb[0].mxu0
      %v552 = vpop.f32.mrb[0].mxu0
      %v553 = vadd.f32 0.0, %v552
      %v554 = vpop.f32.mrb[0].mxu0
      %555 = vmatprep.mubr.bf16.mxu0 0
      %556 = vmatmul.mubr.bf16.gmra.mrb[0].mxu0 %v494
      %v557 = vpop.f32.mrb[0].mxu0
      %v558 = vadd.f32 0.0, %v557
      %v559 = vpop.f32.mrb[0].mxu0
      %v560 = vpop.f32.mrb[0].mxu0
      %v561 = vadd.f32 0.0, %v560
      %v562 = vpop.f32.mrb[0].mxu0
      %563 = vdwg.mxu0
      %v564 = vadd.f32 %v440, %v534
      %v565 = vadd.f32 %v443, %v537
      %v566 = vadd.f32 %v448, %v542
      %v567 = vadd.f32 %v451, %v545
      %v568 = vadd.f32 %v456, %v550
      %v569 = vadd.f32 %v459, %v553
      %v570 = vadd.f32 %v464, %v558
      %v571 = vadd.f32 %v467, %v561
      %s572 = scalar_lea.vmem %s273, 288
      %v573 = vld [vmem:[%s572] sm:$0xff]
      %v574 = vld [vmem:[%s572 + $0x10] sm:$0xff]
      %v575 = vld [vmem:[%s572 + $0x20] sm:$0xff]
      %v576 = vld [vmem:[%s572 + $0x30] sm:$0xff]
      %v577 = vld [vmem:[%s572 + $0x40] sm:$0xff]
      %v578 = vld [vmem:[%s572 + $0x50] sm:$0xff]
      %v579 = vld [vmem:[%s572 + $0x60] sm:$0xff]
      %v580 = vld [vmem:[%s572 + $0x70] sm:$0xff]
      %v581 = vpack.c.bf16 %v574, %v573
      %v582 = vpack.c.bf16 %v576, %v575
      %v583 = vpack.c.bf16 %v578, %v577
      %v584 = vpack.c.bf16 %v580, %v579
      %s585 = scalar_lea.vmem %s1, 6
      %v586 = vld [vmem:[%s585] sm:$0x3]
      %v588 = vsel %vm308, %v581, 0
      %v591 = vsel %vm308, %v582, 0
      %v594 = vsel %vm308, %v583, 0
      %v597 = vsel %vm308, %v584, 0
      %v600 = vsel %vm321, %v586, 0
      %602 = vmatprep.subr.bf16.mxu0 0
      %603 = vmatpush1.bf16.msra.mxu0 %v600
      %604 = vmatprep.subr.bf16.mxu0 0
      %605 = vmatpush1.bf16.msra.mxu0 0
      %606 = vmatprep.subr.bf16.mxu0 0
      %607 = vmatpush1.bf16.msra.mxu0 0
      %608 = vmatprep.subr.bf16.mxu0 0
      %609 = vmatpush1.bf16.msra.mxu0 0
      %610 = vmatprep.subr.bf16.mxu0 0
      %611 = vmatpush1.bf16.msra.mxu0 0
      %612 = vmatprep.subr.bf16.mxu0 0
      %613 = vmatpush1.bf16.msra.mxu0 0
      %614 = vmatprep.subr.bf16.mxu0 0
      %615 = vmatpush1.bf16.msra.mxu0 0
      %616 = vmatprep.subr.bf16.mxu0 0
      %617 = vmatpush1.bf16.msra.mxu0 0
      %618 = vmatprep.subr.bf16.mxu0 0
      %619 = vmatpush1.bf16.msra.mxu0 0
      %620 = vmatprep.subr.bf16.mxu0 0
      %621 = vmatpush1.bf16.msra.mxu0 0
      %622 = vmatprep.subr.bf16.mxu0 0
      %623 = vmatpush1.bf16.msra.mxu0 0
      %624 = vmatprep.subr.bf16.mxu0 0
      %625 = vmatpush1.bf16.msra.mxu0 0
      %626 = vmatprep.subr.bf16.mxu0 0
      %627 = vmatpush1.bf16.msra.mxu0 0
      %628 = vmatprep.subr.bf16.mxu0 0
      %629 = vmatpush1.bf16.msra.mxu0 0
      %630 = vmatprep.subr.bf16.mxu0 0
      %631 = vmatpush1.bf16.msra.mxu0 0
      %632 = vmatprep.subr.bf16.mxu0 0
      %633 = vmatpush1.bf16.msra.mxu0 0
      %634 = vmatprep.mubr.bf16.mxu0 0
      %635 = vmatmul.mubr.bf16.gmra.mrb[0].mxu0 %v588
      %v636 = vpop.f32.mrb[0].mxu0
      %v637 = vadd.f32 0.0, %v636
      %v638 = vpop.f32.mrb[0].mxu0
      %v639 = vpop.f32.mrb[0].mxu0
      %v640 = vadd.f32 0.0, %v639
      %v641 = vpop.f32.mrb[0].mxu0
      %642 = vmatprep.mubr.bf16.mxu0 0
      %643 = vmatmul.mubr.bf16.gmra.mrb[0].mxu0 %v591
      %v644 = vpop.f32.mrb[0].mxu0
      %v645 = vadd.f32 0.0, %v644
      %v646 = vpop.f32.mrb[0].mxu0
      %v647 = vpop.f32.mrb[0].mxu0
      %v648 = vadd.f32 0.0, %v647
      %v649 = vpop.f32.mrb[0].mxu0
      %650 = vmatprep.mubr.bf16.mxu0 0
      %651 = vmatmul.mubr.bf16.gmra.mrb[0].mxu0 %v594
      %v652 = vpop.f32.mrb[0].mxu0
      %v653 = vadd.f32 0.0, %v652
      %v654 = vpop.f32.mrb[0].mxu0
      %v655 = vpop.f32.mrb[0].mxu0
      %v656 = vadd.f32 0.0, %v655
      %v657 = vpop.f32.mrb[0].mxu0
      %658 = vmatprep.mubr.bf16.mxu0 0
      %659 = vmatmul.mubr.bf16.gmra.mrb[0].mxu0 %v597
      %v660 = vpop.f32.mrb[0].mxu0
      %v661 = vadd.f32 0.0, %v660
      %v662 = vpop.f32.mrb[0].mxu0
      %v663 = vpop.f32.mrb[0].mxu0
      %v664 = vadd.f32 0.0, %v663
      %v665 = vpop.f32.mrb[0].mxu0
      %666 = vdwg.mxu0
      %v667 = vadd.f32 %v564, %v637
      %v668 = vadd.f32 %v565, %v640
      %v669 = vadd.f32 %v566, %v645
      %v670 = vadd.f32 %v567, %v648
      %v671 = vadd.f32 %v568, %v653
      %v672 = vadd.f32 %v569, %v656
      %v673 = vadd.f32 %v570, %v661
      %v674 = vadd.f32 %v571, %v664
      %s675 = scalar_lea.vmem %s273, 432
      %v676 = vld [vmem:[%s675] sm:$0xff]
      %v677 = vld [vmem:[%s675 + $0x10] sm:$0xff]
      %v678 = vld [vmem:[%s675 + $0x20] sm:$0xff]
      %v679 = vld [vmem:[%s675 + $0x30] sm:$0xff]
      %v680 = vld [vmem:[%s675 + $0x40] sm:$0xff]
      %v681 = vld [vmem:[%s675 + $0x50] sm:$0xff]
      %v682 = vld [vmem:[%s675 + $0x60] sm:$0xff]
      %v683 = vld [vmem:[%s675 + $0x70] sm:$0xff]
      %v684 = vpack.c.bf16 %v677, %v676
      %v685 = vpack.c.bf16 %v679, %v678
      %v686 = vpack.c.bf16 %v681, %v680
      %v687 = vpack.c.bf16 %v683, %v682
      %s688 = scalar_lea.vmem %s1, 8
      %v689 = vld [vmem:[%s688] sm:$0x3]
      %v691 = vsel %vm308, %v684, 0
      %v694 = vsel %vm308, %v685, 0
      %v697 = vsel %vm308, %v686, 0
      %v700 = vsel %vm308, %v687, 0
      %v703 = vsel %vm321, %v689, 0
      %705 = vmatprep.subr.bf16.mxu0 0
      %706 = vmatpush1.bf16.msra.mxu0 %v703
      %707 = vmatprep.subr.bf16.mxu0 0
      %708 = vmatpush1.bf16.msra.mxu0 0
      %709 = vmatprep.subr.bf16.mxu0 0
      %710 = vmatpush1.bf16.msra.mxu0 0
      %711 = vmatprep.subr.bf16.mxu0 0
      %712 = vmatpush1.bf16.msra.mxu0 0
      %713 = vmatprep.subr.bf16.mxu0 0
      %714 = vmatpush1.bf16.msra.mxu0 0
      %715 = vmatprep.subr.bf16.mxu0 0
      %716 = vmatpush1.bf16.msra.mxu0 0
      %717 = vmatprep.subr.bf16.mxu0 0
      %718 = vmatpush1.bf16.msra.mxu0 0
      %719 = vmatprep.subr.bf16.mxu0 0
      %720 = vmatpush1.bf16.msra.mxu0 0
      %721 = vmatprep.subr.bf16.mxu0 0
      %722 = vmatpush1.bf16.msra.mxu0 0
      %723 = vmatprep.subr.bf16.mxu0 0
      %724 = vmatpush1.bf16.msra.mxu0 0
      %725 = vmatprep.subr.bf16.mxu0 0
      %726 = vmatpush1.bf16.msra.mxu0 0
      %727 = vmatprep.subr.bf16.mxu0 0
      %728 = vmatpush1.bf16.msra.mxu0 0
      %729 = vmatprep.subr.bf16.mxu0 0
      %730 = vmatpush1.bf16.msra.mxu0 0
      %731 = vmatprep.subr.bf16.mxu0 0
      %732 = vmatpush1.bf16.msra.mxu0 0
      %733 = vmatprep.subr.bf16.mxu0 0
      %734 = vmatpush1.bf16.msra.mxu0 0
      %735 = vmatprep.subr.bf16.mxu0 0
      %736 = vmatpush1.bf16.msra.mxu0 0
      %737 = vmatprep.mubr.bf16.mxu0 0
      %738 = vmatmul.mubr.bf16.gmra.mrb[0].mxu0 %v691
      %v739 = vpop.f32.mrb[0].mxu0
      %v740 = vadd.f32 0.0, %v739
      %v741 = vpop.f32.mrb[0].mxu0
      %v742 = vpop.f32.mrb[0].mxu0
      %v743 = vadd.f32 0.0, %v742
      %v744 = vpop.f32.mrb[0].mxu0
      %745 = vmatprep.mubr.bf16.mxu0 0
      %746 = vmatmul.mubr.bf16.gmra.mrb[0].mxu0 %v694
      %v747 = vpop.f32.mrb[0].mxu0
      %v748 = vadd.f32 0.0, %v747
      %v749 = vpop.f32.mrb[0].mxu0
      %v750 = vpop.f32.mrb[0].mxu0
      %v751 = vadd.f32 0.0, %v750
      %v752 = vpop.f32.mrb[0].mxu0
      %753 = vmatprep.mubr.bf16.mxu0 0
      %754 = vmatmul.mubr.bf16.gmra.mrb[0].mxu0 %v697
      %v755 = vpop.f32.mrb[0].mxu0
      %v756 = vadd.f32 0.0, %v755
      %v757 = vpop.f32.mrb[0].mxu0
      %v758 = vpop.f32.mrb[0].mxu0
      %v759 = vadd.f32 0.0, %v758
      %v760 = vpop.f32.mrb[0].mxu0
      %761 = vmatprep.mubr.bf16.mxu0 0
      %762 = vmatmul.mubr.bf16.gmra.mrb[0].mxu0 %v700
      %v763 = vpop.f32.mrb[0].mxu0
      %v764 = vadd.f32 0.0, %v763
      %v765 = vpop.f32.mrb[0].mxu0
      %v766 = vpop.f32.mrb[0].mxu0
      %v767 = vadd.f32 0.0, %v766
      %v768 = vpop.f32.mrb[0].mxu0
      %769 = vdwg.mxu0
      %v770 = vadd.f32 %v667, %v740
      %v771 = vadd.f32 %v668, %v743
      %v772 = vadd.f32 %v669, %v748
      %v773 = vadd.f32 %v670, %v751
      %v774 = vadd.f32 %v671, %v756
      %v775 = vadd.f32 %v672, %v759
      %v776 = vadd.f32 %v673, %v764
      %v777 = vadd.f32 %v674, %v767
      %v778 = vld [vmem:[%s572 + $0x1] sm:$0xff]
      %v779 = vld [vmem:[%s572 + $0x11] sm:$0xff]
      %v780 = vld [vmem:[%s572 + $0x21] sm:$0xff]
      %v781 = vld [vmem:[%s572 + $0x31] sm:$0xff]
      %v782 = vld [vmem:[%s572 + $0x41] sm:$0xff]
      %v783 = vld [vmem:[%s572 + $0x51] sm:$0xff]
      %v784 = vld [vmem:[%s572 + $0x61] sm:$0xff]
      %v785 = vld [vmem:[%s572 + $0x71] sm:$0xff]
      %v786 = vpack.c.bf16 %v779, %v778
      %v787 = vpack.c.bf16 %v781, %v780
      %v788 = vpack.c.bf16 %v783, %v782
      %v789 = vpack.c.bf16 %v785, %v784
      %s790 = scalar_lea.vmem %s1, 10
      %v791 = vld [vmem:[%s790] sm:$0x3]
      %v793 = vsel %vm308, %v786, 0
      %v796 = vsel %vm308, %v787, 0
      %v799 = vsel %vm308, %v788, 0
      %v802 = vsel %vm308, %v789, 0
      %v805 = vsel %vm321, %v791, 0
      %807 = vmatprep.subr.bf16.mxu0 0
      %808 = vmatpush1.bf16.msra.mxu0 %v805
      %809 = vmatprep.subr.bf16.mxu0 0
      %810 = vmatpush1.bf16.msra.mxu0 0
      %811 = vmatprep.subr.bf16.mxu0 0
      %812 = vmatpush1.bf16.msra.mxu0 0
      %813 = vmatprep.subr.bf16.mxu0 0
      %814 = vmatpush1.bf16.msra.mxu0 0
      %815 = vmatprep.subr.bf16.mxu0 0
      %816 = vmatpush1.bf16.msra.mxu0 0
      %817 = vmatprep.subr.bf16.mxu0 0
      %818 = vmatpush1.bf16.msra.mxu0 0
      %819 = vmatprep.subr.bf16.mxu0 0
      %820 = vmatpush1.bf16.msra.mxu0 0
      %821 = vmatprep.subr.bf16.mxu0 0
      %822 = vmatpush1.bf16.msra.mxu0 0
      %823 = vmatprep.subr.bf16.mxu0 0
      %824 = vmatpush1.bf16.msra.mxu0 0
      %825 = vmatprep.subr.bf16.mxu0 0
      %826 = vmatpush1.bf16.msra.mxu0 0
      %827 = vmatprep.subr.bf16.mxu0 0
      %828 = vmatpush1.bf16.msra.mxu0 0
      %829 = vmatprep.subr.bf16.mxu0 0
      %830 = vmatpush1.bf16.msra.mxu0 0
      %831 = vmatprep.subr.bf16.mxu0 0
      %832 = vmatpush1.bf16.msra.mxu0 0
      %833 = vmatprep.subr.bf16.mxu0 0
      %834 = vmatpush1.bf16.msra.mxu0 0
      %835 = vmatprep.subr.bf16.mxu0 0
      %836 = vmatpush1.bf16.msra.mxu0 0
      %837 = vmatprep.subr.bf16.mxu0 0
      %838 = vmatpush1.bf16.msra.mxu0 0
      %839 = vmatprep.mubr.bf16.mxu0 0
      %840 = vmatmul.mubr.bf16.gmra.mrb[0].mxu0 %v793
      %v841 = vpop.f32.mrb[0].mxu0
      %v842 = vadd.f32 0.0, %v841
      %v843 = vpop.f32.mrb[0].mxu0
      %v844 = vpop.f32.mrb[0].mxu0
      %v845 = vadd.f32 0.0, %v844
      %v846 = vpop.f32.mrb[0].mxu0
      %847 = vmatprep.mubr.bf16.mxu0 0
      %848 = vmatmul.mubr.bf16.gmra.mrb[0].mxu0 %v796
      %v849 = vpop.f32.mrb[0].mxu0
      %v850 = vadd.f32 0.0, %v849
      %v851 = vpop.f32.mrb[0].mxu0
      %v852 = vpop.f32.mrb[0].mxu0
      %v853 = vadd.f32 0.0, %v852
      %v854 = vpop.f32.mrb[0].mxu0
      %855 = vmatprep.mubr.bf16.mxu0 0
      %856 = vmatmul.mubr.bf16.gmra.mrb[0].mxu0 %v799
      %v857 = vpop.f32.mrb[0].mxu0
      %v858 = vadd.f32 0.0, %v857
      %v859 = vpop.f32.mrb[0].mxu0
      %v860 = vpop.f32.mrb[0].mxu0
      %v861 = vadd.f32 0.0, %v860
      %v862 = vpop.f32.mrb[0].mxu0
      %863 = vmatprep.mubr.bf16.mxu0 0
      %864 = vmatmul.mubr.bf16.gmra.mrb[0].mxu0 %v802
      %v865 = vpop.f32.mrb[0].mxu0
      %v866 = vadd.f32 0.0, %v865
      %v867 = vpop.f32.mrb[0].mxu0
      %v868 = vpop.f32.mrb[0].mxu0
      %v869 = vadd.f32 0.0, %v868
      %v870 = vpop.f32.mrb[0].mxu0
      %871 = vdwg.mxu0
      %v872 = vadd.f32 %v770, %v842
      %v873 = vadd.f32 %v771, %v845
      %v874 = vadd.f32 %v772, %v850
      %v875 = vadd.f32 %v773, %v853
      %v876 = vadd.f32 %v774, %v858
      %v877 = vadd.f32 %v775, %v861
      %v878 = vadd.f32 %v776, %v866
      %v879 = vadd.f32 %v777, %v869
      %s880 = scalar_lea.vmem %s273, 16
      %v881 = vld [vmem:[%s880] sm:$0xff]
      %v882 = vld [vmem:[%s880 + $0x10] sm:$0xff]
      %v883 = vld [vmem:[%s880 + $0x20] sm:$0xff]
      %v884 = vld [vmem:[%s880 + $0x30] sm:$0xff]
      %v885 = vld [vmem:[%s880 + $0x40] sm:$0xff]
      %v886 = vld [vmem:[%s880 + $0x50] sm:$0xff]
      %v887 = vld [vmem:[%s880 + $0x60] sm:$0xff]
      %v888 = vld [vmem:[%s880 + $0x70] sm:$0xff]
      %v889 = vpack.c.bf16 %v882, %v881
      %v890 = vpack.c.bf16 %v884, %v883
      %v891 = vpack.c.bf16 %v886, %v885
      %v892 = vpack.c.bf16 %v888, %v887
      %s893 = scalar_lea.vmem %s1, 12
      %v894 = vld [vmem:[%s893] sm:$0x3]
      %v896 = vsel %vm308, %v889, 0
      %v899 = vsel %vm308, %v890, 0
      %v902 = vsel %vm308, %v891, 0
      %v905 = vsel %vm308, %v892, 0
      %v908 = vsel %vm321, %v894, 0
      %910 = vmatprep.subr.bf16.mxu0 0
      %911 = vmatpush1.bf16.msra.mxu0 %v908
      %912 = vmatprep.subr.bf16.mxu0 0
      %913 = vmatpush1.bf16.msra.mxu0 0
      %914 = vmatprep.subr.bf16.mxu0 0
      %915 = vmatpush1.bf16.msra.mxu0 0
      %916 = vmatprep.subr.bf16.mxu0 0
      %917 = vmatpush1.bf16.msra.mxu0 0
      %918 = vmatprep.subr.bf16.mxu0 0
      %919 = vmatpush1.bf16.msra.mxu0 0
      %920 = vmatprep.subr.bf16.mxu0 0
      %921 = vmatpush1.bf16.msra.mxu0 0
      %922 = vmatprep.subr.bf16.mxu0 0
      %923 = vmatpush1.bf16.msra.mxu0 0
      %924 = vmatprep.subr.bf16.mxu0 0
      %925 = vmatpush1.bf16.msra.mxu0 0
      %926 = vmatprep.subr.bf16.mxu0 0
      %927 = vmatpush1.bf16.msra.mxu0 0
      %928 = vmatprep.subr.bf16.mxu0 0
      %929 = vmatpush1.bf16.msra.mxu0 0
      %930 = vmatprep.subr.bf16.mxu0 0
      %931 = vmatpush1.bf16.msra.mxu0 0
      %932 = vmatprep.subr.bf16.mxu0 0
      %933 = vmatpush1.bf16.msra.mxu0 0
      %934 = vmatprep.subr.bf16.mxu0 0
      %935 = vmatpush1.bf16.msra.mxu0 0
      %936 = vmatprep.subr.bf16.mxu0 0
      %937 = vmatpush1.bf16.msra.mxu0 0
      %938 = vmatprep.subr.bf16.mxu0 0
      %939 = vmatpush1.bf16.msra.mxu0 0
      %940 = vmatprep.subr.bf16.mxu0 0
      %941 = vmatpush1.bf16.msra.mxu0 0
      %942 = vmatprep.mubr.bf16.mxu0 0
      %943 = vmatmul.mubr.bf16.gmra.mrb[0].mxu0 %v896
      %v944 = vpop.f32.mrb[0].mxu0
      %v945 = vadd.f32 0.0, %v944
      %v946 = vpop.f32.mrb[0].mxu0
      %v947 = vpop.f32.mrb[0].mxu0
      %v948 = vadd.f32 0.0, %v947
      %v949 = vpop.f32.mrb[0].mxu0
      %950 = vmatprep.mubr.bf16.mxu0 0
      %951 = vmatmul.mubr.bf16.gmra.mrb[0].mxu0 %v899
      %v952 = vpop.f32.mrb[0].mxu0
      %v953 = vadd.f32 0.0, %v952
      %v954 = vpop.f32.mrb[0].mxu0
      %v955 = vpop.f32.mrb[0].mxu0
      %v956 = vadd.f32 0.0, %v955
      %v957 = vpop.f32.mrb[0].mxu0
      %958 = vmatprep.mubr.bf16.mxu0 0
      %959 = vmatmul.mubr.bf16.gmra.mrb[0].mxu0 %v902
      %v960 = vpop.f32.mrb[0].mxu0
      %v961 = vadd.f32 0.0, %v960
      %v962 = vpop.f32.mrb[0].mxu0
      %v963 = vpop.f32.mrb[0].mxu0
      %v964 = vadd.f32 0.0, %v963
      %v965 = vpop.f32.mrb[0].mxu0
      %966 = vmatprep.mubr.bf16.mxu0 0
      %967 = vmatmul.mubr.bf16.gmra.mrb[0].mxu0 %v905
      %v968 = vpop.f32.mrb[0].mxu0
      %v969 = vadd.f32 0.0, %v968
      %v970 = vpop.f32.mrb[0].mxu0
      %v971 = vpop.f32.mrb[0].mxu0
      %v972 = vadd.f32 0.0, %v971
      %v973 = vpop.f32.mrb[0].mxu0
      %974 = vdwg.mxu0
      %v975 = vadd.f32 %v872, %v945
      %v976 = vadd.f32 %v873, %v948
      %v977 = vadd.f32 %v874, %v953
      %v978 = vadd.f32 %v875, %v956
      %v979 = vadd.f32 %v876, %v961
      %v980 = vadd.f32 %v877, %v964
      %v981 = vadd.f32 %v878, %v969
      %v982 = vadd.f32 %v879, %v972
      %s983 = scalar_lea.vmem %s273, 160
      %v984 = vld [vmem:[%s983] sm:$0xff]
      %v985 = vld [vmem:[%s983 + $0x10] sm:$0xff]
      %v986 = vld [vmem:[%s983 + $0x20] sm:$0xff]
      %v987 = vld [vmem:[%s983 + $0x30] sm:$0xff]
      %v988 = vld [vmem:[%s983 + $0x40] sm:$0xff]
      %v989 = vld [vmem:[%s983 + $0x50] sm:$0xff]
      %v990 = vld [vmem:[%s983 + $0x60] sm:$0xff]
      %v991 = vld [vmem:[%s983 + $0x70] sm:$0xff]
      %v992 = vpack.c.bf16 %v985, %v984
      %v993 = vpack.c.bf16 %v987, %v986
      %v994 = vpack.c.bf16 %v989, %v988
      %v995 = vpack.c.bf16 %v991, %v990
      %s996 = scalar_lea.vmem %s1, 14
      %v997 = vld [vmem:[%s996] sm:$0x3]
      %v999 = vsel %vm308, %v992, 0
      %v1002 = vsel %vm308, %v993, 0
      %v1005 = vsel %vm308, %v994, 0
      %v1008 = vsel %vm308, %v995, 0
      %v1011 = vsel %vm321, %v997, 0
      %1013 = vmatprep.subr.bf16.mxu0 0
      %1014 = vmatpush1.bf16.msra.mxu0 %v1011
      %1015 = vmatprep.subr.bf16.mxu0 0
      %1016 = vmatpush1.bf16.msra.mxu0 0
      %1017 = vmatprep.subr.bf16.mxu0 0
      %1018 = vmatpush1.bf16.msra.mxu0 0
      %1019 = vmatprep.subr.bf16.mxu0 0
      %1020 = vmatpush1.bf16.msra.mxu0 0
      %1021 = vmatprep.subr.bf16.mxu0 0
      %1022 = vmatpush1.bf16.msra.mxu0 0
      %1023 = vmatprep.subr.bf16.mxu0 0
      %1024 = vmatpush1.bf16.msra.mxu0 0
      %1025 = vmatprep.subr.bf16.mxu0 0
      %1026 = vmatpush1.bf16.msra.mxu0 0
      %1027 = vmatprep.subr.bf16.mxu0 0
      %1028 = vmatpush1.bf16.msra.mxu0 0
      %1029 = vmatprep.subr.bf16.mxu0 0
      %1030 = vmatpush1.bf16.msra.mxu0 0
      %1031 = vmatprep.subr.bf16.mxu0 0
      %1032 = vmatpush1.bf16.msra.mxu0 0
      %1033 = vmatprep.subr.bf16.mxu0 0
      %1034 = vmatpush1.bf16.msra.mxu0 0
      %1035 = vmatprep.subr.bf16.mxu0 0
      %1036 = vmatpush1.bf16.msra.mxu0 0
      %1037 = vmatprep.subr.bf16.mxu0 0
      %1038 = vmatpush1.bf16.msra.mxu0 0
      %1039 = vmatprep.subr.bf16.mxu0 0
      %1040 = vmatpush1.bf16.msra.mxu0 0
      %1041 = vmatprep.subr.bf16.mxu0 0
      %1042 = vmatpush1.bf16.msra.mxu0 0
      %1043 = vmatprep.subr.bf16.mxu0 0
      %1044 = vmatpush1.bf16.msra.mxu0 0
      %1045 = vmatprep.mubr.bf16.mxu0 0
      %1046 = vmatmul.mubr.bf16.gmra.mrb[0].mxu0 %v999
      %v1047 = vpop.f32.mrb[0].mxu0
      %v1048 = vadd.f32 0.0, %v1047
      %v1049 = vpop.f32.mrb[0].mxu0
      %v1050 = vpop.f32.mrb[0].mxu0
      %v1051 = vadd.f32 0.0, %v1050
      %v1052 = vpop.f32.mrb[0].mxu0
      %1053 = vmatprep.mubr.bf16.mxu0 0
      %1054 = vmatmul.mubr.bf16.gmra.mrb[0].mxu0 %v1002
      %v1055 = vpop.f32.mrb[0].mxu0
      %v1056 = vadd.f32 0.0, %v1055
      %v1057 = vpop.f32.mrb[0].mxu0
      %v1058 = vpop.f32.mrb[0].mxu0
      %v1059 = vadd.f32 0.0, %v1058
      %v1060 = vpop.f32.mrb[0].mxu0
      %1061 = vmatprep.mubr.bf16.mxu0 0
      %1062 = vmatmul.mubr.bf16.gmra.mrb[0].mxu0 %v1005
      %v1063 = vpop.f32.mrb[0].mxu0
      %v1064 = vadd.f32 0.0, %v1063
      %v1065 = vpop.f32.mrb[0].mxu0
      %v1066 = vpop.f32.mrb[0].mxu0
      %v1067 = vadd.f32 0.0, %v1066
      %v1068 = vpop.f32.mrb[0].mxu0
      %1069 = vmatprep.mubr.bf16.mxu0 0
      %1070 = vmatmul.mubr.bf16.gmra.mrb[0].mxu0 %v1008
      %v1071 = vpop.f32.mrb[0].mxu0
      %v1072 = vadd.f32 0.0, %v1071
      %v1073 = vpop.f32.mrb[0].mxu0
      %v1074 = vpop.f32.mrb[0].mxu0
      %v1075 = vadd.f32 0.0, %v1074
      %v1076 = vpop.f32.mrb[0].mxu0
      %1077 = vdwg.mxu0
      %v1078 = vadd.f32 %v975, %v1048
      %v1079 = vadd.f32 %v976, %v1051
      %v1080 = vadd.f32 %v977, %v1056
      %v1081 = vadd.f32 %v978, %v1059
      %v1082 = vadd.f32 %v979, %v1064
      %v1083 = vadd.f32 %v980, %v1067
      %v1084 = vadd.f32 %v981, %v1072
      %v1085 = vadd.f32 %v982, %v1075
      %v1086 = vld [vmem:[%s880 + $0x1] sm:$0xff]
      %v1087 = vld [vmem:[%s880 + $0x11] sm:$0xff]
      %v1088 = vld [vmem:[%s880 + $0x21] sm:$0xff]
      %v1089 = vld [vmem:[%s880 + $0x31] sm:$0xff]
      %v1090 = vld [vmem:[%s880 + $0x41] sm:$0xff]
      %v1091 = vld [vmem:[%s880 + $0x51] sm:$0xff]
      %v1092 = vld [vmem:[%s880 + $0x61] sm:$0xff]
      %v1093 = vld [vmem:[%s880 + $0x71] sm:$0xff]
      %v1094 = vpack.c.bf16 %v1087, %v1086
      %v1095 = vpack.c.bf16 %v1089, %v1088
      %v1096 = vpack.c.bf16 %v1091, %v1090
      %v1097 = vpack.c.bf16 %v1093, %v1092
      %s1098 = scalar_lea.vmem %s1, 16
      %v1099 = vld [vmem:[%s1098] sm:$0x3]
      %v1101 = vsel %vm308, %v1094, 0
      %v1104 = vsel %vm308, %v1095, 0
      %v1107 = vsel %vm308, %v1096, 0
      %v1110 = vsel %vm308, %v1097, 0
      %v1113 = vsel %vm321, %v1099, 0
      %1115 = vmatprep.subr.bf16.mxu0 0
      %1116 = vmatpush1.bf16.msra.mxu0 %v1113
      %1117 = vmatprep.subr.bf16.mxu0 0
      %1118 = vmatpush1.bf16.msra.mxu0 0
      %1119 = vmatprep.subr.bf16.mxu0 0
      %1120 = vmatpush1.bf16.msra.mxu0 0
      %1121 = vmatprep.subr.bf16.mxu0 0
      %1122 = vmatpush1.bf16.msra.mxu0 0
      %1123 = vmatprep.subr.bf16.mxu0 0
      %1124 = vmatpush1.bf16.msra.mxu0 0
      %1125 = vmatprep.subr.bf16.mxu0 0
      %1126 = vmatpush1.bf16.msra.mxu0 0
      %1127 = vmatprep.subr.bf16.mxu0 0
      %1128 = vmatpush1.bf16.msra.mxu0 0
      %1129 = vmatprep.subr.bf16.mxu0 0
      %1130 = vmatpush1.bf16.msra.mxu0 0
      %1131 = vmatprep.subr.bf16.mxu0 0
      %1132 = vmatpush1.bf16.msra.mxu0 0
      %1133 = vmatprep.subr.bf16.mxu0 0
      %1134 = vmatpush1.bf16.msra.mxu0 0
      %1135 = vmatprep.subr.bf16.mxu0 0
      %1136 = vmatpush1.bf16.msra.mxu0 0
      %1137 = vmatprep.subr.bf16.mxu0 0
      %1138 = vmatpush1.bf16.msra.mxu0 0
      %1139 = vmatprep.subr.bf16.mxu0 0
      %1140 = vmatpush1.bf16.msra.mxu0 0
      %1141 = vmatprep.subr.bf16.mxu0 0
      %1142 = vmatpush1.bf16.msra.mxu0 0
      %1143 = vmatprep.subr.bf16.mxu0 0
      %1144 = vmatpush1.bf16.msra.mxu0 0
      %1145 = vmatprep.subr.bf16.mxu0 0
      %1146 = vmatpush1.bf16.msra.mxu0 0
      %1147 = vmatprep.mubr.bf16.mxu0 0
      %1148 = vmatmul.mubr.bf16.gmra.mrb[0].mxu0 %v1101
      %v1149 = vpop.f32.mrb[0].mxu0
      %v1150 = vadd.f32 0.0, %v1149
      %v1151 = vpop.f32.mrb[0].mxu0
      %v1152 = vpop.f32.mrb[0].mxu0
      %v1153 = vadd.f32 0.0, %v1152
      %v1154 = vpop.f32.mrb[0].mxu0
      %1155 = vmatprep.mubr.bf16.mxu0 0
      %1156 = vmatmul.mubr.bf16.gmra.mrb[0].mxu0 %v1104
      %v1157 = vpop.f32.mrb[0].mxu0
      %v1158 = vadd.f32 0.0, %v1157
      %v1159 = vpop.f32.mrb[0].mxu0
      %v1160 = vpop.f32.mrb[0].mxu0
      %v1161 = vadd.f32 0.0, %v1160
      %v1162 = vpop.f32.mrb[0].mxu0
      %1163 = vmatprep.mubr.bf16.mxu0 0
      %1164 = vmatmul.mubr.bf16.gmra.mrb[0].mxu0 %v1107
      %v1165 = vpop.f32.mrb[0].mxu0
      %v1166 = vadd.f32 0.0, %v1165
      %v1167 = vpop.f32.mrb[0].mxu0
      %v1168 = vpop.f32.mrb[0].mxu0
      %v1169 = vadd.f32 0.0, %v1168
      %v1170 = vpop.f32.mrb[0].mxu0
      %1171 = vmatprep.mubr.bf16.mxu0 0
      %1172 = vmatmul.mubr.bf16.gmra.mrb[0].mxu0 %v1110
      %v1173 = vpop.f32.mrb[0].mxu0
      %v1174 = vadd.f32 0.0, %v1173
      %v1175 = vpop.f32.mrb[0].mxu0
      %v1176 = vpop.f32.mrb[0].mxu0
      %v1177 = vadd.f32 0.0, %v1176
      %v1178 = vpop.f32.mrb[0].mxu0
      %1179 = vdwg.mxu0
      %v1180 = vadd.f32 %v1078, %v1150
      %v1181 = vadd.f32 %v1079, %v1153
      %v1182 = vadd.f32 %v1080, %v1158
      %v1183 = vadd.f32 %v1081, %v1161
      %v1184 = vadd.f32 %v1082, %v1166
      %v1185 = vadd.f32 %v1083, %v1169
      %v1186 = vadd.f32 %v1084, %v1174
      %v1187 = vadd.f32 %v1085, %v1177
      %v1188 = vld [vmem:[%s2] sm:$0x1]
      %v1190 = vlaneseq
      %v1191 = vshrl.u32 %v1190, 7
      %v1192 = vsub.s32 0, %v1191
      %v1193 = vrot.slane %v1188, %v1192
      %v1195 = vadd.f32 %v1180, %v1193
      %v1196 = vadd.f32 %v1181, %v1193
      %v1197 = vadd.f32 %v1182, %v1193
      %v1198 = vadd.f32 %v1183, %v1193
      %v1199 = vadd.f32 %v1184, %v1193
      %v1200 = vadd.f32 %v1185, %v1193
      %v1201 = vadd.f32 %v1186, %v1193
      %v1202 = vadd.f32 %v1187, %v1193
      %v1203 = vmax.f32 %v1195, 0.0
      %v1204 = vmax.f32 %v1196, 0.0
      %v1205 = vmax.f32 %v1197, 0.0
      %v1206 = vmax.f32 %v1198, 0.0
      %v1207 = vmax.f32 %v1199, 0.0
      %v1208 = vmax.f32 %v1200, 0.0
      %v1209 = vmax.f32 %v1201, 0.0
      %v1210 = vmax.f32 %v1202, 0.0
      %v1211 = vld [vmem:[%s5] sm:$0x3]
      %v1212 = vld [vmem:[%s6] sm:$0x1]
      %v1214 = vlaneseq
      %v1215 = vshrl.u32 %v1214, 7
      %v1216 = vsub.s32 0, %v1215
      %v1217 = vrot.slane %v1212, %v1216
      %v1220 = vsel %vm321, %v1211, 0
      %1222 = vmatprep.subr.bf16.mxu0 0
      %1223 = vmatpush1.bf16.msra.mxu0 %v1220
      %1224 = vmatprep.subr.bf16.mxu0 0
      %1225 = vmatpush1.bf16.msra.mxu0 0
      %1226 = vmatprep.subr.bf16.mxu0 0
      %1227 = vmatpush1.bf16.msra.mxu0 0
      %1228 = vmatprep.subr.bf16.mxu0 0
      %1229 = vmatpush1.bf16.msra.mxu0 0
      %1230 = vmatprep.subr.bf16.mxu0 0
      %1231 = vmatpush1.bf16.msra.mxu0 0
      %1232 = vmatprep.subr.bf16.mxu0 0
      %1233 = vmatpush1.bf16.msra.mxu0 0
      %1234 = vmatprep.subr.bf16.mxu0 0
      %1235 = vmatpush1.bf16.msra.mxu0 0
      %1236 = vmatprep.subr.bf16.mxu0 0
      %1237 = vmatpush1.bf16.msra.mxu0 0
      %1238 = vmatprep.subr.bf16.mxu0 0
      %1239 = vmatpush1.bf16.msra.mxu0 0
      %1240 = vmatprep.subr.bf16.mxu0 0
      %1241 = vmatpush1.bf16.msra.mxu0 0
      %1242 = vmatprep.subr.bf16.mxu0 0
      %1243 = vmatpush1.bf16.msra.mxu0 0
      %1244 = vmatprep.subr.bf16.mxu0 0
      %1245 = vmatpush1.bf16.msra.mxu0 0
      %1246 = vmatprep.subr.bf16.mxu0 0
      %1247 = vmatpush1.bf16.msra.mxu0 0
      %1248 = vmatprep.subr.bf16.mxu0 0
      %1249 = vmatpush1.bf16.msra.mxu0 0
      %1250 = vmatprep.subr.bf16.mxu0 0
      %1251 = vmatpush1.bf16.msra.mxu0 0
      %1252 = vmatprep.subr.bf16.mxu0 0
      %1253 = vmatpush1.bf16.msra.mxu0 0
      %1254 = vmatprep.mubr.bf16.mxu0 0
      %1255 = vmatmul.mubr.bf16.gmra.mrb[0].mxu0 %v691
      %v1256 = vpop.f32.mrb[0].mxu0
      %v1257 = vadd.f32 %v1217, %v1256
      %v1258 = vpop.f32.mrb[0].mxu0
      %v1259 = vpop.f32.mrb[0].mxu0
      %v1260 = vadd.f32 %v1217, %v1259
      %v1261 = vpop.f32.mrb[0].mxu0
      %1262 = vmatprep.mubr.bf16.mxu0 0
      %1263 = vmatmul.mubr.bf16.gmra.mrb[0].mxu0 %v694
      %v1264 = vpop.f32.mrb[0].mxu0
      %v1265 = vadd.f32 %v1217, %v1264
      %v1266 = vpop.f32.mrb[0].mxu0
      %v1267 = vpop.f32.mrb[0].mxu0
      %v1268 = vadd.f32 %v1217, %v1267
      %v1269 = vpop.f32.mrb[0].mxu0
      %1270 = vmatprep.mubr.bf16.mxu0 0
      %1271 = vmatmul.mubr.bf16.gmra.mrb[0].mxu0 %v697
      %v1272 = vpop.f32.mrb[0].mxu0
      %v1273 = vadd.f32 %v1217, %v1272
      %v1274 = vpop.f32.mrb[0].mxu0
      %v1275 = vpop.f32.mrb[0].mxu0
      %v1276 = vadd.f32 %v1217, %v1275
      %v1277 = vpop.f32.mrb[0].mxu0
      %1278 = vmatprep.mubr.bf16.mxu0 0
      %1279 = vmatmul.mubr.bf16.gmra.mrb[0].mxu0 %v700
      %v1280 = vpop.f32.mrb[0].mxu0
      %v1281 = vadd.f32 %v1217, %v1280
      %v1282 = vpop.f32.mrb[0].mxu0
      %v1283 = vpop.f32.mrb[0].mxu0
      %v1284 = vadd.f32 %v1217, %v1283
      %v1285 = vpop.f32.mrb[0].mxu0
      %1286 = vdwg.mxu0
      %vm1287 = vcmask 64512
      %1288 = vst.msk [vmem:[#allocation2] sm:$0xff] %vm1287, 0.0
      %vm1289 = vcmask 58368
      %1290 = vst.msk [vmem:[#allocation2 + $0x8] sm:$0x3] %vm1289, 0.0
      %s1291 = scalar_lea.vmem [#allocation2], 144
      %1292 = vst.msk [vmem:[%s1291] sm:$0xff] %vm1287, 0.0
      %1293 = vst.msk [vmem:[%s1291 + $0x8] sm:$0x3] %vm1289, 0.0
      %vm1294 = vcmask 57344
      %1295 = vst.msk [vmem:[#allocation2] sm:$0x1] %vm1294, 0.0
      %1296 = vst.msk [vmem:[#allocation2 + $0x10] sm:$0x1] %vm1294, 0.0
      %1297 = vst.msk [vmem:[#allocation2 + $0x20] sm:$0x1] %vm1294, 0.0
      %1298 = vst.msk [vmem:[#allocation2 + $0x30] sm:$0x1] %vm1294, 0.0
      %1299 = vst.msk [vmem:[#allocation2 + $0x40] sm:$0x1] %vm1294, 0.0
      %1300 = vst.msk [vmem:[#allocation2 + $0x50] sm:$0x1] %vm1294, 0.0
      %1301 = vst.msk [vmem:[#allocation2 + $0x60] sm:$0x1] %vm1294, 0.0
      %1302 = vst.msk [vmem:[#allocation2 + $0x70] sm:$0x1] %vm1294, 0.0
      %1303 = vst.msk [vmem:[#allocation2 + $0x80] sm:$0x1] %vm1294, 0.0
      %1304 = vst.msk [vmem:[#allocation2 + $0x90] sm:$0x1] %vm1294, 0.0
      %1305 = vst.msk [vmem:[#allocation2 + $0x9] sm:$0x1] %vm1294, 0.0
      %1306 = vst.msk [vmem:[#allocation2 + $0x19] sm:$0x1] %vm1294, 0.0
      %1307 = vst.msk [vmem:[#allocation2 + $0x29] sm:$0x1] %vm1294, 0.0
      %1308 = vst.msk [vmem:[#allocation2 + $0x39] sm:$0x1] %vm1294, 0.0
      %1309 = vst.msk [vmem:[#allocation2 + $0x49] sm:$0x1] %vm1294, 0.0
      %1310 = vst.msk [vmem:[#allocation2 + $0x59] sm:$0x1] %vm1294, 0.0
      %1311 = vst.msk [vmem:[#allocation2 + $0x69] sm:$0x1] %vm1294, 0.0
      %1312 = vst.msk [vmem:[#allocation2 + $0x79] sm:$0x1] %vm1294, 0.0
      %1313 = vst.msk [vmem:[#allocation2 + $0x89] sm:$0x1] %vm1294, 0.0
      %1314 = vst.msk [vmem:[#allocation2 + $0x99] sm:$0x1] %vm1294, 0.0
      %s1315 = scalar_lea.vmem [#allocation2], 16
      %1316 = vst.msk [vmem:[%s1315 + $0x1] sm:$0xff] %vm1287, %v1203
      %1317 = vst.msk [vmem:[%s1315 + $0x11] sm:$0xff] %vm1287, %v1204
      %1318 = vst.msk [vmem:[%s1315 + $0x21] sm:$0xff] %vm1287, %v1205
      %1319 = vst.msk [vmem:[%s1315 + $0x31] sm:$0xff] %vm1287, %v1206
      %1320 = vst.msk [vmem:[%s1315 + $0x41] sm:$0xff] %vm1287, %v1207
      %1321 = vst.msk [vmem:[%s1315 + $0x51] sm:$0xff] %vm1287, %v1208
      %1322 = vst.msk [vmem:[%s1315 + $0x61] sm:$0xff] %vm1287, %v1209
      %1323 = vst.msk [vmem:[%s1315 + $0x71] sm:$0xff] %vm1287, %v1210
      %v1324 = vld [vmem:[#allocation2] sm:$0xff]
      %v1325 = vld [vmem:[#allocation2 + $0x10] sm:$0xff]
      %v1326 = vld [vmem:[#allocation2 + $0x20] sm:$0xff]
      %v1327 = vld [vmem:[#allocation2 + $0x30] sm:$0xff]
      %v1328 = vld [vmem:[#allocation2 + $0x40] sm:$0xff]
      %v1329 = vld [vmem:[#allocation2 + $0x50] sm:$0xff]
      %v1330 = vld [vmem:[#allocation2 + $0x60] sm:$0xff]
      %v1331 = vld [vmem:[#allocation2 + $0x70] sm:$0xff]
      %v1332 = vpack.c.bf16 %v1325, %v1324
      %v1333 = vpack.c.bf16 %v1327, %v1326
      %v1334 = vpack.c.bf16 %v1329, %v1328
      %v1335 = vpack.c.bf16 %v1331, %v1330
      %v1336 = vld [vmem:[%s3] sm:$0xf]
      %v1337 = vld [vmem:[#allocation2 + $0x1] sm:$0xff]
      %v1338 = vld [vmem:[#allocation2 + $0x11] sm:$0xff]
      %v1339 = vld [vmem:[#allocation2 + $0x21] sm:$0xff]
      %v1340 = vld [vmem:[#allocation2 + $0x31] sm:$0xff]
      %v1341 = vld [vmem:[#allocation2 + $0x41] sm:$0xff]
      %v1342 = vld [vmem:[#allocation2 + $0x51] sm:$0xff]
      %v1343 = vld [vmem:[#allocation2 + $0x61] sm:$0xff]
      %v1344 = vld [vmem:[#allocation2 + $0x71] sm:$0xff]
      %v1345 = vpack.c.bf16 %v1338, %v1337
      %v1346 = vpack.c.bf16 %v1340, %v1339
      %v1347 = vpack.c.bf16 %v1342, %v1341
      %v1348 = vpack.c.bf16 %v1344, %v1343
      %s1349 = scalar_lea.vmem %s3, 4
      %v1350 = vld [vmem:[%s1349] sm:$0xf]
      %v1352 = vsel %vm1287, %v1345, 0
      %v1355 = vsel %vm1287, %v1346, 0
      %v1358 = vsel %vm1287, %v1347, 0
      %v1361 = vsel %vm1287, %v1348, 0
      %vm1363 = vcmask 1043456
      %v1365 = vsel %vm1363, %v1350, 0
      %1367 = vmatprep.subr.bf16.mxu0 0
      %1368 = vmatpush1.bf16.msra.mxu0 %v1365
      %1369 = vmatprep.subr.bf16.mxu0 0
      %1370 = vmatpush1.bf16.msra.mxu0 0
      %1371 = vmatprep.subr.bf16.mxu0 0
      %1372 = vmatpush1.bf16.msra.mxu0 0
      %1373 = vmatprep.subr.bf16.mxu0 0
      %1374 = vmatpush1.bf16.msra.mxu0 0
      %1375 = vmatprep.subr.bf16.mxu0 0
      %1376 = vmatpush1.bf16.msra.mxu0 0
      %1377 = vmatprep.subr.bf16.mxu0 0
      %1378 = vmatpush1.bf16.msra.mxu0 0
      %1379 = vmatprep.subr.bf16.mxu0 0
      %1380 = vmatpush1.bf16.msra.mxu0 0
      %1381 = vmatprep.subr.bf16.mxu0 0
      %1382 = vmatpush1.bf16.msra.mxu0 0
      %1383 = vmatprep.subr.bf16.mxu0 0
      %1384 = vmatpush1.bf16.msra.mxu0 0
      %1385 = vmatprep.subr.bf16.mxu0 0
      %1386 = vmatpush1.bf16.msra.mxu0 0
      %1387 = vmatprep.subr.bf16.mxu0 0
      %1388 = vmatpush1.bf16.msra.mxu0 0
      %1389 = vmatprep.subr.bf16.mxu0 0
      %1390 = vmatpush1.bf16.msra.mxu0 0
      %1391 = vmatprep.subr.bf16.mxu0 0
      %1392 = vmatpush1.bf16.msra.mxu0 0
      %1393 = vmatprep.subr.bf16.mxu0 0
      %1394 = vmatpush1.bf16.msra.mxu0 0
      %1395 = vmatprep.subr.bf16.mxu0 0
      %1396 = vmatpush1.bf16.msra.mxu0 0
      %1397 = vmatprep.subr.bf16.mxu0 0
      %1398 = vmatpush1.bf16.msra.mxu0 0
      %1399 = vmatprep.mubr.bf16.mxu0 0
      %1400 = vmatmul.mubr.bf16.gmra.mrb[0].mxu0 %v1352
      %v1401 = vpop.f32.mrb[0].mxu0
      %v1402 = vadd.f32 0.0, %v1401
      %v1403 = vpop.f32.mrb[0].mxu0
      %v1404 = vpop.f32.mrb[0].mxu0
      %v1405 = vadd.f32 0.0, %v1404
      %v1406 = vpop.f32.mrb[0].mxu0
      %1407 = vmatprep.mubr.bf16.mxu0 0
      %1408 = vmatmul.mubr.bf16.gmra.mrb[0].mxu0 %v1355
      %v1409 = vpop.f32.mrb[0].mxu0
      %v1410 = vadd.f32 0.0, %v1409
      %v1411 = vpop.f32.mrb[0].mxu0
      %v1412 = vpop.f32.mrb[0].mxu0
      %v1413 = vadd.f32 0.0, %v1412
      %v1414 = vpop.f32.mrb[0].mxu0
      %1415 = vmatprep.mubr.bf16.mxu0 0
      %1416 = vmatmul.mubr.bf16.gmra.mrb[0].mxu0 %v1358
      %v1417 = vpop.f32.mrb[0].mxu0
      %v1418 = vadd.f32 0.0, %v1417
      %v1419 = vpop.f32.mrb[0].mxu0
      %v1420 = vpop.f32.mrb[0].mxu0
      %v1421 = vadd.f32 0.0, %v1420
      %v1422 = vpop.f32.mrb[0].mxu0
      %1423 = vmatprep.mubr.bf16.mxu0 0
      %1424 = vmatmul.mubr.bf16.gmra.mrb[0].mxu0 %v1361
      %v1425 = vpop.f32.mrb[0].mxu0
      %v1426 = vadd.f32 0.0, %v1425
      %v1427 = vpop.f32.mrb[0].mxu0
      %v1428 = vpop.f32.mrb[0].mxu0
      %v1429 = vadd.f32 0.0, %v1428
      %v1430 = vpop.f32.mrb[0].mxu0
      %1431 = vdwg.mxu0
      %v1433 = vsel %vm1287, %v1332, 0
      %v1436 = vsel %vm1287, %v1333, 0
      %v1439 = vsel %vm1287, %v1334, 0
      %v1442 = vsel %vm1287, %v1335, 0
      %v1445 = vsel %vm1363, %v1336, 0
      %1447 = vmatprep.subr.bf16.mxu0 0
      %1448 = vmatpush1.bf16.msra.mxu0 %v1445
      %1449 = vmatprep.subr.bf16.mxu0 0
      %1450 = vmatpush1.bf16.msra.mxu0 0
      %1451 = vmatprep.subr.bf16.mxu0 0
      %1452 = vmatpush1.bf16.msra.mxu0 0
      %1453 = vmatprep.subr.bf16.mxu0 0
      %1454 = vmatpush1.bf16.msra.mxu0 0
      %1455 = vmatprep.subr.bf16.mxu0 0
      %1456 = vmatpush1.bf16.msra.mxu0 0
      %1457 = vmatprep.subr.bf16.mxu0 0
      %1458 = vmatpush1.bf16.msra.mxu0 0
      %1459 = vmatprep.subr.bf16.mxu0 0
      %1460 = vmatpush1.bf16.msra.mxu0 0
      %1461 = vmatprep.subr.bf16.mxu0 0
      %1462 = vmatpush1.bf16.msra.mxu0 0
      %1463 = vmatprep.subr.bf16.mxu0 0
      %1464 = vmatpush1.bf16.msra.mxu0 0
      %1465 = vmatprep.subr.bf16.mxu0 0
      %1466 = vmatpush1.bf16.msra.mxu0 0
      %1467 = vmatprep.subr.bf16.mxu0 0
      %1468 = vmatpush1.bf16.msra.mxu0 0
      %1469 = vmatprep.subr.bf16.mxu0 0
      %1470 = vmatpush1.bf16.msra.mxu0 0
      %1471 = vmatprep.subr.bf16.mxu0 0
      %1472 = vmatpush1.bf16.msra.mxu0 0
      %1473 = vmatprep.subr.bf16.mxu0 0
      %1474 = vmatpush1.bf16.msra.mxu0 0
      %1475 = vmatprep.subr.bf16.mxu0 0
      %1476 = vmatpush1.bf16.msra.mxu0 0
      %1477 = vmatprep.subr.bf16.mxu0 0
      %1478 = vmatpush1.bf16.msra.mxu0 0
      %1479 = vmatprep.mubr.bf16.mxu0 0
      %1480 = vmatmul.mubr.bf16.gmra.mrb[0].mxu0 %v1433
      %v1481 = vpop.f32.mrb[0].mxu0
      %v1482 = vadd.f32 %v1402, %v1481
      %v1483 = vpop.f32.mrb[0].mxu0
      %v1484 = vpop.f32.mrb[0].mxu0
      %v1485 = vadd.f32 %v1405, %v1484
      %v1486 = vpop.f32.mrb[0].mxu0
      %1487 = vmatprep.mubr.bf16.mxu0 0
      %1488 = vmatmul.mubr.bf16.gmra.mrb[0].mxu0 %v1436
      %v1489 = vpop.f32.mrb[0].mxu0
      %v1490 = vadd.f32 %v1410, %v1489
      %v1491 = vpop.f32.mrb[0].mxu0
      %v1492 = vpop.f32.mrb[0].mxu0
      %v1493 = vadd.f32 %v1413, %v1492
      %v1494 = vpop.f32.mrb[0].mxu0
      %1495 = vmatprep.mubr.bf16.mxu0 0
      %1496 = vmatmul.mubr.bf16.gmra.mrb[0].mxu0 %v1439
      %v1497 = vpop.f32.mrb[0].mxu0
      %v1498 = vadd.f32 %v1418, %v1497
      %v1499 = vpop.f32.mrb[0].mxu0
      %v1500 = vpop.f32.mrb[0].mxu0
      %v1501 = vadd.f32 %v1421, %v1500
      %v1502 = vpop.f32.mrb[0].mxu0
      %1503 = vmatprep.mubr.bf16.mxu0 0
      %1504 = vmatmul.mubr.bf16.gmra.mrb[0].mxu0 %v1442
      %v1505 = vpop.f32.mrb[0].mxu0
      %v1506 = vadd.f32 %v1426, %v1505
      %v1507 = vpop.f32.mrb[0].mxu0
      %v1508 = vpop.f32.mrb[0].mxu0
      %v1509 = vadd.f32 %v1429, %v1508
      %v1510 = vpop.f32.mrb[0].mxu0
      %1511 = vdwg.mxu0
      %v1512 = vld [vmem:[#allocation2 + $0x2] sm:$0xff]
      %v1513 = vld [vmem:[#allocation2 + $0x12] sm:$0xff]
      %v1514 = vld [vmem:[#allocation2 + $0x22] sm:$0xff]
      %v1515 = vld [vmem:[#allocation2 + $0x32] sm:$0xff]
      %v1516 = vld [vmem:[#allocation2 + $0x42] sm:$0xff]
      %v1517 = vld [vmem:[#allocation2 + $0x52] sm:$0xff]
      %v1518 = vld [vmem:[#allocation2 + $0x62] sm:$0xff]
      %v1519 = vld [vmem:[#allocation2 + $0x72] sm:$0xff]
      %v1520 = vpack.c.bf16 %v1513, %v1512
      %v1521 = vpack.c.bf16 %v1515, %v1514
      %v1522 = vpack.c.bf16 %v1517, %v1516
      %v1523 = vpack.c.bf16 %v1519, %v1518
      %s1524 = scalar_lea.vmem %s3, 8
      %v1525 = vld [vmem:[%s1524] sm:$0xf]
      %v1527 = vsel %vm1287, %v1520, 0
      %v1530 = vsel %vm1287, %v1521, 0
      %v1533 = vsel %vm1287, %v1522, 0
      %v1536 = vsel %vm1287, %v1523, 0
      %v1539 = vsel %vm1363, %v1525, 0
      %1541 = vmatprep.subr.bf16.mxu0 0
      %1542 = vmatpush1.bf16.msra.mxu0 %v1539
      %1543 = vmatprep.subr.bf16.mxu0 0
      %1544 = vmatpush1.bf16.msra.mxu0 0
      %1545 = vmatprep.subr.bf16.mxu0 0
      %1546 = vmatpush1.bf16.msra.mxu0 0
      %1547 = vmatprep.subr.bf16.mxu0 0
      %1548 = vmatpush1.bf16.msra.mxu0 0
      %1549 = vmatprep.subr.bf16.mxu0 0
      %1550 = vmatpush1.bf16.msra.mxu0 0
      %1551 = vmatprep.subr.bf16.mxu0 0
      %1552 = vmatpush1.bf16.msra.mxu0 0
      %1553 = vmatprep.subr.bf16.mxu0 0
      %1554 = vmatpush1.bf16.msra.mxu0 0
      %1555 = vmatprep.subr.bf16.mxu0 0
      %1556 = vmatpush1.bf16.msra.mxu0 0
      %1557 = vmatprep.subr.bf16.mxu0 0
      %1558 = vmatpush1.bf16.msra.mxu0 0
      %1559 = vmatprep.subr.bf16.mxu0 0
      %1560 = vmatpush1.bf16.msra.mxu0 0
      %1561 = vmatprep.subr.bf16.mxu0 0
      %1562 = vmatpush1.bf16.msra.mxu0 0
      %1563 = vmatprep.subr.bf16.mxu0 0
      %1564 = vmatpush1.bf16.msra.mxu0 0
      %1565 = vmatprep.subr.bf16.mxu0 0
      %1566 = vmatpush1.bf16.msra.mxu0 0
      %1567 = vmatprep.subr.bf16.mxu0 0
      %1568 = vmatpush1.bf16.msra.mxu0 0
      %1569 = vmatprep.subr.bf16.mxu0 0
      %1570 = vmatpush1.bf16.msra.mxu0 0
      %1571 = vmatprep.subr.bf16.mxu0 0
      %1572 = vmatpush1.bf16.msra.mxu0 0
      %1573 = vmatprep.mubr.bf16.mxu0 0
      %1574 = vmatmul.mubr.bf16.gmra.mrb[0].mxu0 %v1527
      %v1575 = vpop.f32.mrb[0].mxu0
      %v1576 = vadd.f32 0.0, %v1575
      %v1577 = vpop.f32.mrb[0].mxu0
      %v1578 = vpop.f32.mrb[0].mxu0
      %v1579 = vadd.f32 0.0, %v1578
      %v1580 = vpop.f32.mrb[0].mxu0
      %1581 = vmatprep.mubr.bf16.mxu0 0
      %1582 = vmatmul.mubr.bf16.gmra.mrb[0].mxu0 %v1530
      %v1583 = vpop.f32.mrb[0].mxu0
      %v1584 = vadd.f32 0.0, %v1583
      %v1585 = vpop.f32.mrb[0].mxu0
      %v1586 = vpop.f32.mrb[0].mxu0
      %v1587 = vadd.f32 0.0, %v1586
      %v1588 = vpop.f32.mrb[0].mxu0
      %1589 = vmatprep.mubr.bf16.mxu0 0
      %1590 = vmatmul.mubr.bf16.gmra.mrb[0].mxu0 %v1533
      %v1591 = vpop.f32.mrb[0].mxu0
      %v1592 = vadd.f32 0.0, %v1591
      %v1593 = vpop.f32.mrb[0].mxu0
      %v1594 = vpop.f32.mrb[0].mxu0
      %v1595 = vadd.f32 0.0, %v1594
      %v1596 = vpop.f32.mrb[0].mxu0
      %1597 = vmatprep.mubr.bf16.mxu0 0
      %1598 = vmatmul.mubr.bf16.gmra.mrb[0].mxu0 %v1536
      %v1599 = vpop.f32.mrb[0].mxu0
      %v1600 = vadd.f32 0.0, %v1599
      %v1601 = vpop.f32.mrb[0].mxu0
      %v1602 = vpop.f32.mrb[0].mxu0
      %v1603 = vadd.f32 0.0, %v1602
      %v1604 = vpop.f32.mrb[0].mxu0
      %1605 = vdwg.mxu0
      %v1606 = vadd.f32 %v1482, %v1576
      %v1607 = vadd.f32 %v1485, %v1579
      %v1608 = vadd.f32 %v1490, %v1584
      %v1609 = vadd.f32 %v1493, %v1587
      %v1610 = vadd.f32 %v1498, %v1592
      %v1611 = vadd.f32 %v1501, %v1595
      %v1612 = vadd.f32 %v1506, %v1600
      %v1613 = vadd.f32 %v1509, %v1603
      %v1614 = vld [vmem:[%s1315] sm:$0xff]
      %v1615 = vld [vmem:[%s1315 + $0x10] sm:$0xff]
      %v1616 = vld [vmem:[%s1315 + $0x20] sm:$0xff]
      %v1617 = vld [vmem:[%s1315 + $0x30] sm:$0xff]
      %v1618 = vld [vmem:[%s1315 + $0x40] sm:$0xff]
      %v1619 = vld [vmem:[%s1315 + $0x50] sm:$0xff]
      %v1620 = vld [vmem:[%s1315 + $0x60] sm:$0xff]
      %v1621 = vld [vmem:[%s1315 + $0x70] sm:$0xff]
      %v1622 = vpack.c.bf16 %v1615, %v1614
      %v1623 = vpack.c.bf16 %v1617, %v1616
      %v1624 = vpack.c.bf16 %v1619, %v1618
      %v1625 = vpack.c.bf16 %v1621, %v1620
      %s1626 = scalar_lea.vmem %s3, 12
      %v1627 = vld [vmem:[%s1626] sm:$0xf]
      %v1629 = vsel %vm1287, %v1622, 0
      %v1632 = vsel %vm1287, %v1623, 0
      %v1635 = vsel %vm1287, %v1624, 0
      %v1638 = vsel %vm1287, %v1625, 0
      %v1641 = vsel %vm1363, %v1627, 0
      %1643 = vmatprep.subr.bf16.mxu0 0
      %1644 = vmatpush1.bf16.msra.mxu0 %v1641
      %1645 = vmatprep.subr.bf16.mxu0 0
      %1646 = vmatpush1.bf16.msra.mxu0 0
      %1647 = vmatprep.subr.bf16.mxu0 0
      %1648 = vmatpush1.bf16.msra.mxu0 0
      %1649 = vmatprep.subr.bf16.mxu0 0
      %1650 = vmatpush1.bf16.msra.mxu0 0
      %1651 = vmatprep.subr.bf16.mxu0 0
      %1652 = vmatpush1.bf16.msra.mxu0 0
      %1653 = vmatprep.subr.bf16.mxu0 0
      %1654 = vmatpush1.bf16.msra.mxu0 0
      %1655 = vmatprep.subr.bf16.mxu0 0
      %1656 = vmatpush1.bf16.msra.mxu0 0
      %1657 = vmatprep.subr.bf16.mxu0 0
      %1658 = vmatpush1.bf16.msra.mxu0 0
      %1659 = vmatprep.subr.bf16.mxu0 0
      %1660 = vmatpush1.bf16.msra.mxu0 0
      %1661 = vmatprep.subr.bf16.mxu0 0
      %1662 = vmatpush1.bf16.msra.mxu0 0
      %1663 = vmatprep.subr.bf16.mxu0 0
      %1664 = vmatpush1.bf16.msra.mxu0 0
      %1665 = vmatprep.subr.bf16.mxu0 0
      %1666 = vmatpush1.bf16.msra.mxu0 0
      %1667 = vmatprep.subr.bf16.mxu0 0
      %1668 = vmatpush1.bf16.msra.mxu0 0
      %1669 = vmatprep.subr.bf16.mxu0 0
      %1670 = vmatpush1.bf16.msra.mxu0 0
      %1671 = vmatprep.subr.bf16.mxu0 0
      %1672 = vmatpush1.bf16.msra.mxu0 0
      %1673 = vmatprep.subr.bf16.mxu0 0
      %1674 = vmatpush1.bf16.msra.mxu0 0
      %1675 = vmatprep.mubr.bf16.mxu0 0
      %1676 = vmatmul.mubr.bf16.gmra.mrb[0].mxu0 %v1629
      %v1677 = vpop.f32.mrb[0].mxu0
      %v1678 = vadd.f32 0.0, %v1677
      %v1679 = vpop.f32.mrb[0].mxu0
      %v1680 = vpop.f32.mrb[0].mxu0
      %v1681 = vadd.f32 0.0, %v1680
      %v1682 = vpop.f32.mrb[0].mxu0
      %1683 = vmatprep.mubr.bf16.mxu0 0
      %1684 = vmatmul.mubr.bf16.gmra.mrb[0].mxu0 %v1632
      %v1685 = vpop.f32.mrb[0].mxu0
      %v1686 = vadd.f32 0.0, %v1685
      %v1687 = vpop.f32.mrb[0].mxu0
      %v1688 = vpop.f32.mrb[0].mxu0
      %v1689 = vadd.f32 0.0, %v1688
      %v1690 = vpop.f32.mrb[0].mxu0
      %1691 = vmatprep.mubr.bf16.mxu0 0
      %1692 = vmatmul.mubr.bf16.gmra.mrb[0].mxu0 %v1635
      %v1693 = vpop.f32.mrb[0].mxu0
      %v1694 = vadd.f32 0.0, %v1693
      %v1695 = vpop.f32.mrb[0].mxu0
      %v1696 = vpop.f32.mrb[0].mxu0
      %v1697 = vadd.f32 0.0, %v1696
      %v1698 = vpop.f32.mrb[0].mxu0
      %1699 = vmatprep.mubr.bf16.mxu0 0
      %1700 = vmatmul.mubr.bf16.gmra.mrb[0].mxu0 %v1638
      %v1701 = vpop.f32.mrb[0].mxu0
      %v1702 = vadd.f32 0.0, %v1701
      %v1703 = vpop.f32.mrb[0].mxu0
      %v1704 = vpop.f32.mrb[0].mxu0
      %v1705 = vadd.f32 0.0, %v1704
      %v1706 = vpop.f32.mrb[0].mxu0
      %1707 = vdwg.mxu0
      %v1708 = vadd.f32 %v1606, %v1678
      %v1709 = vadd.f32 %v1607, %v1681
      %v1710 = vadd.f32 %v1608, %v1686
      %v1711 = vadd.f32 %v1609, %v1689
      %v1712 = vadd.f32 %v1610, %v1694
      %v1713 = vadd.f32 %v1611, %v1697
      %v1714 = vadd.f32 %v1612, %v1702
      %v1715 = vadd.f32 %v1613, %v1705
      %v1716 = vld [vmem:[%s1315 + $0x1] sm:$0xff]
      %v1717 = vld [vmem:[%s1315 + $0x11] sm:$0xff]
      %v1718 = vld [vmem:[%s1315 + $0x21] sm:$0xff]
      %v1719 = vld [vmem:[%s1315 + $0x31] sm:$0xff]
      %v1720 = vld [vmem:[%s1315 + $0x41] sm:$0xff]
      %v1721 = vld [vmem:[%s1315 + $0x51] sm:$0xff]
      %v1722 = vld [vmem:[%s1315 + $0x61] sm:$0xff]
      %v1723 = vld [vmem:[%s1315 + $0x71] sm:$0xff]
      %v1724 = vpack.c.bf16 %v1717, %v1716
      %v1725 = vpack.c.bf16 %v1719, %v1718
      %v1726 = vpack.c.bf16 %v1721, %v1720
      %v1727 = vpack.c.bf16 %v1723, %v1722
      %s1728 = scalar_lea.vmem %s3, 16
      %v1729 = vld [vmem:[%s1728] sm:$0xf]
      %v1731 = vsel %vm1287, %v1724, 0
      %v1734 = vsel %vm1287, %v1725, 0
      %v1737 = vsel %vm1287, %v1726, 0
      %v1740 = vsel %vm1287, %v1727, 0
      %v1743 = vsel %vm1363, %v1729, 0
      %1745 = vmatprep.subr.bf16.mxu0 0
      %1746 = vmatpush1.bf16.msra.mxu0 %v1743
      %1747 = vmatprep.subr.bf16.mxu0 0
      %1748 = vmatpush1.bf16.msra.mxu0 0
      %1749 = vmatprep.subr.bf16.mxu0 0
      %1750 = vmatpush1.bf16.msra.mxu0 0
      %1751 = vmatprep.subr.bf16.mxu0 0
      %1752 = vmatpush1.bf16.msra.mxu0 0
      %1753 = vmatprep.subr.bf16.mxu0 0
      %1754 = vmatpush1.bf16.msra.mxu0 0
      %1755 = vmatprep.subr.bf16.mxu0 0
      %1756 = vmatpush1.bf16.msra.mxu0 0
      %1757 = vmatprep.subr.bf16.mxu0 0
      %1758 = vmatpush1.bf16.msra.mxu0 0
      %1759 = vmatprep.subr.bf16.mxu0 0
      %1760 = vmatpush1.bf16.msra.mxu0 0
      %1761 = vmatprep.subr.bf16.mxu0 0
      %1762 = vmatpush1.bf16.msra.mxu0 0
      %1763 = vmatprep.subr.bf16.mxu0 0
      %1764 = vmatpush1.bf16.msra.mxu0 0
      %1765 = vmatprep.subr.bf16.mxu0 0
      %1766 = vmatpush1.bf16.msra.mxu0 0
      %1767 = vmatprep.subr.bf16.mxu0 0
      %1768 = vmatpush1.bf16.msra.mxu0 0
      %1769 = vmatprep.subr.bf16.mxu0 0
      %1770 = vmatpush1.bf16.msra.mxu0 0
      %1771 = vmatprep.subr.bf16.mxu0 0
      %1772 = vmatpush1.bf16.msra.mxu0 0
      %1773 = vmatprep.subr.bf16.mxu0 0
      %1774 = vmatpush1.bf16.msra.mxu0 0
      %1775 = vmatprep.subr.bf16.mxu0 0
      %1776 = vmatpush1.bf16.msra.mxu0 0
      %1777 = vmatprep.mubr.bf16.mxu0 0
      %1778 = vmatmul.mubr.bf16.gmra.mrb[0].mxu0 %v1731
      %v1779 = vpop.f32.mrb[0].mxu0
      %v1780 = vadd.f32 0.0, %v1779
      %v1781 = vpop.f32.mrb[0].mxu0
      %v1782 = vpop.f32.mrb[0].mxu0
      %v1783 = vadd.f32 0.0, %v1782
      %v1784 = vpop.f32.mrb[0].mxu0
      %1785 = vmatprep.mubr.bf16.mxu0 0
      %1786 = vmatmul.mubr.bf16.gmra.mrb[0].mxu0 %v1734
      %v1787 = vpop.f32.mrb[0].mxu0
      %v1788 = vadd.f32 0.0, %v1787
      %v1789 = vpop.f32.mrb[0].mxu0
      %v1790 = vpop.f32.mrb[0].mxu0
      %v1791 = vadd.f32 0.0, %v1790
      %v1792 = vpop.f32.mrb[0].mxu0
      %1793 = vmatprep.mubr.bf16.mxu0 0
      %1794 = vmatmul.mubr.bf16.gmra.mrb[0].mxu0 %v1737
      %v1795 = vpop.f32.mrb[0].mxu0
      %v1796 = vadd.f32 0.0, %v1795
      %v1797 = vpop.f32.mrb[0].mxu0
      %v1798 = vpop.f32.mrb[0].mxu0
      %v1799 = vadd.f32 0.0, %v1798
      %v1800 = vpop.f32.mrb[0].mxu0
      %1801 = vmatprep.mubr.bf16.mxu0 0
      %1802 = vmatmul.mubr.bf16.gmra.mrb[0].mxu0 %v1740
      %v1803 = vpop.f32.mrb[0].mxu0
      %v1804 = vadd.f32 0.0, %v1803
      %v1805 = vpop.f32.mrb[0].mxu0
      %v1806 = vpop.f32.mrb[0].mxu0
      %v1807 = vadd.f32 0.0, %v1806
      %v1808 = vpop.f32.mrb[0].mxu0
      %1809 = vdwg.mxu0
      %v1810 = vadd.f32 %v1708, %v1780
      %v1811 = vadd.f32 %v1709, %v1783
      %v1812 = vadd.f32 %v1710, %v1788
      %v1813 = vadd.f32 %v1711, %v1791
      %v1814 = vadd.f32 %v1712, %v1796
      %v1815 = vadd.f32 %v1713, %v1799
      %v1816 = vadd.f32 %v1714, %v1804
      %v1817 = vadd.f32 %v1715, %v1807
      %v1818 = vld [vmem:[%s1315 + $0x2] sm:$0xff]
      %v1819 = vld [vmem:[%s1315 + $0x12] sm:$0xff]
      %v1820 = vld [vmem:[%s1315 + $0x22] sm:$0xff]
      %v1821 = vld [vmem:[%s1315 + $0x32] sm:$0xff]
      %v1822 = vld [vmem:[%s1315 + $0x42] sm:$0xff]
      %v1823 = vld [vmem:[%s1315 + $0x52] sm:$0xff]
      %v1824 = vld [vmem:[%s1315 + $0x62] sm:$0xff]
      %v1825 = vld [vmem:[%s1315 + $0x72] sm:$0xff]
      %v1826 = vpack.c.bf16 %v1819, %v1818
      %v1827 = vpack.c.bf16 %v1821, %v1820
      %v1828 = vpack.c.bf16 %v1823, %v1822
      %v1829 = vpack.c.bf16 %v1825, %v1824
      %s1830 = scalar_lea.vmem %s3, 20
      %v1831 = vld [vmem:[%s1830] sm:$0xf]
      %v1833 = vsel %vm1287, %v1826, 0
      %v1836 = vsel %vm1287, %v1827, 0
      %v1839 = vsel %vm1287, %v1828, 0
      %v1842 = vsel %vm1287, %v1829, 0
      %v1845 = vsel %vm1363, %v1831, 0
      %1847 = vmatprep.subr.bf16.mxu0 0
      %1848 = vmatpush1.bf16.msra.mxu0 %v1845
      %1849 = vmatprep.subr.bf16.mxu0 0
      %1850 = vmatpush1.bf16.msra.mxu0 0
      %1851 = vmatprep.subr.bf16.mxu0 0
      %1852 = vmatpush1.bf16.msra.mxu0 0
      %1853 = vmatprep.subr.bf16.mxu0 0
      %1854 = vmatpush1.bf16.msra.mxu0 0
      %1855 = vmatprep.subr.bf16.mxu0 0
      %1856 = vmatpush1.bf16.msra.mxu0 0
      %1857 = vmatprep.subr.bf16.mxu0 0
      %1858 = vmatpush1.bf16.msra.mxu0 0
      %1859 = vmatprep.subr.bf16.mxu0 0
      %1860 = vmatpush1.bf16.msra.mxu0 0
      %1861 = vmatprep.subr.bf16.mxu0 0
      %1862 = vmatpush1.bf16.msra.mxu0 0
      %1863 = vmatprep.subr.bf16.mxu0 0
      %1864 = vmatpush1.bf16.msra.mxu0 0
      %1865 = vmatprep.subr.bf16.mxu0 0
      %1866 = vmatpush1.bf16.msra.mxu0 0
      %1867 = vmatprep.subr.bf16.mxu0 0
      %1868 = vmatpush1.bf16.msra.mxu0 0
      %1869 = vmatprep.subr.bf16.mxu0 0
      %1870 = vmatpush1.bf16.msra.mxu0 0
      %1871 = vmatprep.subr.bf16.mxu0 0
      %1872 = vmatpush1.bf16.msra.mxu0 0
      %1873 = vmatprep.subr.bf16.mxu0 0
      %1874 = vmatpush1.bf16.msra.mxu0 0
      %1875 = vmatprep.subr.bf16.mxu0 0
      %1876 = vmatpush1.bf16.msra.mxu0 0
      %1877 = vmatprep.subr.bf16.mxu0 0
      %1878 = vmatpush1.bf16.msra.mxu0 0
      %1879 = vmatprep.mubr.bf16.mxu0 0
      %1880 = vmatmul.mubr.bf16.gmra.mrb[0].mxu0 %v1833
      %v1881 = vpop.f32.mrb[0].mxu0
      %v1882 = vadd.f32 0.0, %v1881
      %v1883 = vpop.f32.mrb[0].mxu0
      %v1884 = vpop.f32.mrb[0].mxu0
      %v1885 = vadd.f32 0.0, %v1884
      %v1886 = vpop.f32.mrb[0].mxu0
      %1887 = vmatprep.mubr.bf16.mxu0 0
      %1888 = vmatmul.mubr.bf16.gmra.mrb[0].mxu0 %v1836
      %v1889 = vpop.f32.mrb[0].mxu0
      %v1890 = vadd.f32 0.0, %v1889
      %v1891 = vpop.f32.mrb[0].mxu0
      %v1892 = vpop.f32.mrb[0].mxu0
      %v1893 = vadd.f32 0.0, %v1892
      %v1894 = vpop.f32.mrb[0].mxu0
      %1895 = vmatprep.mubr.bf16.mxu0 0
      %1896 = vmatmul.mubr.bf16.gmra.mrb[0].mxu0 %v1839
      %v1897 = vpop.f32.mrb[0].mxu0
      %v1898 = vadd.f32 0.0, %v1897
      %v1899 = vpop.f32.mrb[0].mxu0
      %v1900 = vpop.f32.mrb[0].mxu0
      %v1901 = vadd.f32 0.0, %v1900
      %v1902 = vpop.f32.mrb[0].mxu0
      %1903 = vmatprep.mubr.bf16.mxu0 0
      %1904 = vmatmul.mubr.bf16.gmra.mrb[0].mxu0 %v1842
      %v1905 = vpop.f32.mrb[0].mxu0
      %v1906 = vadd.f32 0.0, %v1905
      %v1907 = vpop.f32.mrb[0].mxu0
      %v1908 = vpop.f32.mrb[0].mxu0
      %v1909 = vadd.f32 0.0, %v1908
      %v1910 = vpop.f32.mrb[0].mxu0
      %1911 = vdwg.mxu0
      %v1912 = vadd.f32 %v1810, %v1882
      %v1913 = vadd.f32 %v1811, %v1885
      %v1914 = vadd.f32 %v1812, %v1890
      %v1915 = vadd.f32 %v1813, %v1893
      %v1916 = vadd.f32 %v1814, %v1898
      %v1917 = vadd.f32 %v1815, %v1901
      %v1918 = vadd.f32 %v1816, %v1906
      %v1919 = vadd.f32 %v1817, %v1909
      %s1920 = scalar_lea.vmem [#allocation2], 32
      %v1921 = vld [vmem:[%s1920] sm:$0xff]
      %v1922 = vld [vmem:[%s1920 + $0x10] sm:$0xff]
      %v1923 = vld [vmem:[%s1920 + $0x20] sm:$0xff]
      %v1924 = vld [vmem:[%s1920 + $0x30] sm:$0xff]
      %v1925 = vld [vmem:[%s1920 + $0x40] sm:$0xff]
      %v1926 = vld [vmem:[%s1920 + $0x50] sm:$0xff]
      %v1927 = vld [vmem:[%s1920 + $0x60] sm:$0xff]
      %v1928 = vld [vmem:[%s1920 + $0x70] sm:$0xff]
      %v1929 = vpack.c.bf16 %v1922, %v1921
      %v1930 = vpack.c.bf16 %v1924, %v1923
      %v1931 = vpack.c.bf16 %v1926, %v1925
      %v1932 = vpack.c.bf16 %v1928, %v1927
      %s1933 = scalar_lea.vmem %s3, 24
      %v1934 = vld [vmem:[%s1933] sm:$0xf]
      %v1936 = vsel %vm1287, %v1929, 0
      %v1939 = vsel %vm1287, %v1930, 0
      %v1942 = vsel %vm1287, %v1931, 0
      %v1945 = vsel %vm1287, %v1932, 0
      %v1948 = vsel %vm1363, %v1934, 0
      %1950 = vmatprep.subr.bf16.mxu0 0
      %1951 = vmatpush1.bf16.msra.mxu0 %v1948
      %1952 = vmatprep.subr.bf16.mxu0 0
      %1953 = vmatpush1.bf16.msra.mxu0 0
      %1954 = vmatprep.subr.bf16.mxu0 0
      %1955 = vmatpush1.bf16.msra.mxu0 0
      %1956 = vmatprep.subr.bf16.mxu0 0
      %1957 = vmatpush1.bf16.msra.mxu0 0
      %1958 = vmatprep.subr.bf16.mxu0 0
      %1959 = vmatpush1.bf16.msra.mxu0 0
      %1960 = vmatprep.subr.bf16.mxu0 0
      %1961 = vmatpush1.bf16.msra.mxu0 0
      %1962 = vmatprep.subr.bf16.mxu0 0
      %1963 = vmatpush1.bf16.msra.mxu0 0
      %1964 = vmatprep.subr.bf16.mxu0 0
      %1965 = vmatpush1.bf16.msra.mxu0 0
      %1966 = vmatprep.subr.bf16.mxu0 0
      %1967 = vmatpush1.bf16.msra.mxu0 0
      %1968 = vmatprep.subr.bf16.mxu0 0
      %1969 = vmatpush1.bf16.msra.mxu0 0
      %1970 = vmatprep.subr.bf16.mxu0 0
      %1971 = vmatpush1.bf16.msra.mxu0 0
      %1972 = vmatprep.subr.bf16.mxu0 0
      %1973 = vmatpush1.bf16.msra.mxu0 0
      %1974 = vmatprep.subr.bf16.mxu0 0
      %1975 = vmatpush1.bf16.msra.mxu0 0
      %1976 = vmatprep.subr.bf16.mxu0 0
      %1977 = vmatpush1.bf16.msra.mxu0 0
      %1978 = vmatprep.subr.bf16.mxu0 0
      %1979 = vmatpush1.bf16.msra.mxu0 0
      %1980 = vmatprep.subr.bf16.mxu0 0
      %1981 = vmatpush1.bf16.msra.mxu0 0
      %1982 = vmatprep.mubr.bf16.mxu0 0
      %1983 = vmatmul.mubr.bf16.gmra.mrb[0].mxu0 %v1936
      %v1984 = vpop.f32.mrb[0].mxu0
      %v1985 = vadd.f32 0.0, %v1984
      %v1986 = vpop.f32.mrb[0].mxu0
      %v1987 = vpop.f32.mrb[0].mxu0
      %v1988 = vadd.f32 0.0, %v1987
      %v1989 = vpop.f32.mrb[0].mxu0
      %1990 = vmatprep.mubr.bf16.mxu0 0
      %1991 = vmatmul.mubr.bf16.gmra.mrb[0].mxu0 %v1939
      %v1992 = vpop.f32.mrb[0].mxu0
      %v1993 = vadd.f32 0.0, %v1992
      %v1994 = vpop.f32.mrb[0].mxu0
      %v1995 = vpop.f32.mrb[0].mxu0
      %v1996 = vadd.f32 0.0, %v1995
      %v1997 = vpop.f32.mrb[0].mxu0
      %1998 = vmatprep.mubr.bf16.mxu0 0
      %1999 = vmatmul.mubr.bf16.gmra.mrb[0].mxu0 %v1942
      %v2000 = vpop.f32.mrb[0].mxu0
      %v2001 = vadd.f32 0.0, %v2000
      %v2002 = vpop.f32.mrb[0].mxu0
      %v2003 = vpop.f32.mrb[0].mxu0
      %v2004 = vadd.f32 0.0, %v2003
      %v2005 = vpop.f32.mrb[0].mxu0
      %2006 = vmatprep.mubr.bf16.mxu0 0
      %2007 = vmatmul.mubr.bf16.gmra.mrb[0].mxu0 %v1945
      %v2008 = vpop.f32.mrb[0].mxu0
      %v2009 = vadd.f32 0.0, %v2008
      %v2010 = vpop.f32.mrb[0].mxu0
      %v2011 = vpop.f32.mrb[0].mxu0
      %v2012 = vadd.f32 0.0, %v2011
      %v2013 = vpop.f32.mrb[0].mxu0
      %2014 = vdwg.mxu0
      %v2015 = vadd.f32 %v1912, %v1985
      %v2016 = vadd.f32 %v1913, %v1988
      %v2017 = vadd.f32 %v1914, %v1993
      %v2018 = vadd.f32 %v1915, %v1996
      %v2019 = vadd.f32 %v1916, %v2001
      %v2020 = vadd.f32 %v1917, %v2004
      %v2021 = vadd.f32 %v1918, %v2009
      %v2022 = vadd.f32 %v1919, %v2012
      %v2023 = vld [vmem:[%s1920 + $0x1] sm:$0xff]
      %v2024 = vld [vmem:[%s1920 + $0x11] sm:$0xff]
      %v2025 = vld [vmem:[%s1920 + $0x21] sm:$0xff]
      %v2026 = vld [vmem:[%s1920 + $0x31] sm:$0xff]
      %v2027 = vld [vmem:[%s1920 + $0x41] sm:$0xff]
      %v2028 = vld [vmem:[%s1920 + $0x51] sm:$0xff]
      %v2029 = vld [vmem:[%s1920 + $0x61] sm:$0xff]
      %v2030 = vld [vmem:[%s1920 + $0x71] sm:$0xff]
      %v2031 = vpack.c.bf16 %v2024, %v2023
      %v2032 = vpack.c.bf16 %v2026, %v2025
      %v2033 = vpack.c.bf16 %v2028, %v2027
      %v2034 = vpack.c.bf16 %v2030, %v2029
      %s2035 = scalar_lea.vmem %s3, 28
      %v2036 = vld [vmem:[%s2035] sm:$0xf]
      %v2038 = vsel %vm1287, %v2031, 0
      %v2041 = vsel %vm1287, %v2032, 0
      %v2044 = vsel %vm1287, %v2033, 0
      %v2047 = vsel %vm1287, %v2034, 0
      %v2050 = vsel %vm1363, %v2036, 0
      %2052 = vmatprep.subr.bf16.mxu0 0
      %2053 = vmatpush1.bf16.msra.mxu0 %v2050
      %2054 = vmatprep.subr.bf16.mxu0 0
      %2055 = vmatpush1.bf16.msra.mxu0 0
      %2056 = vmatprep.subr.bf16.mxu0 0
      %2057 = vmatpush1.bf16.msra.mxu0 0
      %2058 = vmatprep.subr.bf16.mxu0 0
      %2059 = vmatpush1.bf16.msra.mxu0 0
      %2060 = vmatprep.subr.bf16.mxu0 0
      %2061 = vmatpush1.bf16.msra.mxu0 0
      %2062 = vmatprep.subr.bf16.mxu0 0
      %2063 = vmatpush1.bf16.msra.mxu0 0
      %2064 = vmatprep.subr.bf16.mxu0 0
      %2065 = vmatpush1.bf16.msra.mxu0 0
      %2066 = vmatprep.subr.bf16.mxu0 0
      %2067 = vmatpush1.bf16.msra.mxu0 0
      %2068 = vmatprep.subr.bf16.mxu0 0
      %2069 = vmatpush1.bf16.msra.mxu0 0
      %2070 = vmatprep.subr.bf16.mxu0 0
      %2071 = vmatpush1.bf16.msra.mxu0 0
      %2072 = vmatprep.subr.bf16.mxu0 0
      %2073 = vmatpush1.bf16.msra.mxu0 0
      %2074 = vmatprep.subr.bf16.mxu0 0
      %2075 = vmatpush1.bf16.msra.mxu0 0
      %2076 = vmatprep.subr.bf16.mxu0 0
      %2077 = vmatpush1.bf16.msra.mxu0 0
      %2078 = vmatprep.subr.bf16.mxu0 0
      %2079 = vmatpush1.bf16.msra.mxu0 0
      %2080 = vmatprep.subr.bf16.mxu0 0
      %2081 = vmatpush1.bf16.msra.mxu0 0
      %2082 = vmatprep.subr.bf16.mxu0 0
      %2083 = vmatpush1.bf16.msra.mxu0 0
      %2084 = vmatprep.mubr.bf16.mxu0 0
      %2085 = vmatmul.mubr.bf16.gmra.mrb[0].mxu0 %v2038
      %v2086 = vpop.f32.mrb[0].mxu0
      %v2087 = vadd.f32 0.0, %v2086
      %v2088 = vpop.f32.mrb[0].mxu0
      %v2089 = vpop.f32.mrb[0].mxu0
      %v2090 = vadd.f32 0.0, %v2089
      %v2091 = vpop.f32.mrb[0].mxu0
      %2092 = vmatprep.mubr.bf16.mxu0 0
      %2093 = vmatmul.mubr.bf16.gmra.mrb[0].mxu0 %v2041
      %v2094 = vpop.f32.mrb[0].mxu0
      %v2095 = vadd.f32 0.0, %v2094
      %v2096 = vpop.f32.mrb[0].mxu0
      %v2097 = vpop.f32.mrb[0].mxu0
      %v2098 = vadd.f32 0.0, %v2097
      %v2099 = vpop.f32.mrb[0].mxu0
      %2100 = vmatprep.mubr.bf16.mxu0 0
      %2101 = vmatmul.mubr.bf16.gmra.mrb[0].mxu0 %v2044
      %v2102 = vpop.f32.mrb[0].mxu0
      %v2103 = vadd.f32 0.0, %v2102
      %v2104 = vpop.f32.mrb[0].mxu0
      %v2105 = vpop.f32.mrb[0].mxu0
      %v2106 = vadd.f32 0.0, %v2105
      %v2107 = vpop.f32.mrb[0].mxu0
      %2108 = vmatprep.mubr.bf16.mxu0 0
      %2109 = vmatmul.mubr.bf16.gmra.mrb[0].mxu0 %v2047
      %v2110 = vpop.f32.mrb[0].mxu0
      %v2111 = vadd.f32 0.0, %v2110
      %v2112 = vpop.f32.mrb[0].mxu0
      %v2113 = vpop.f32.mrb[0].mxu0
      %v2114 = vadd.f32 0.0, %v2113
      %v2115 = vpop.f32.mrb[0].mxu0
      %2116 = vdwg.mxu0
      %v2117 = vadd.f32 %v2015, %v2087
      %v2118 = vadd.f32 %v2016, %v2090
      %v2119 = vadd.f32 %v2017, %v2095
      %v2120 = vadd.f32 %v2018, %v2098
      %v2121 = vadd.f32 %v2019, %v2103
      %v2122 = vadd.f32 %v2020, %v2106
      %v2123 = vadd.f32 %v2021, %v2111
      %v2124 = vadd.f32 %v2022, %v2114
      %v2125 = vld [vmem:[%s1920 + $0x2] sm:$0xff]
      %v2126 = vld [vmem:[%s1920 + $0x12] sm:$0xff]
      %v2127 = vld [vmem:[%s1920 + $0x22] sm:$0xff]
      %v2128 = vld [vmem:[%s1920 + $0x32] sm:$0xff]
      %v2129 = vld [vmem:[%s1920 + $0x42] sm:$0xff]
      %v2130 = vld [vmem:[%s1920 + $0x52] sm:$0xff]
      %v2131 = vld [vmem:[%s1920 + $0x62] sm:$0xff]
      %v2132 = vld [vmem:[%s1920 + $0x72] sm:$0xff]
      %v2133 = vpack.c.bf16 %v2126, %v2125
      %v2134 = vpack.c.bf16 %v2128, %v2127
      %v2135 = vpack.c.bf16 %v2130, %v2129
      %v2136 = vpack.c.bf16 %v2132, %v2131
      %s2137 = scalar_lea.vmem %s3, 32
      %v2138 = vld [vmem:[%s2137] sm:$0xf]
      %v2140 = vsel %vm1287, %v2133, 0
      %v2143 = vsel %vm1287, %v2134, 0
      %v2146 = vsel %vm1287, %v2135, 0
      %v2149 = vsel %vm1287, %v2136, 0
      %v2152 = vsel %vm1363, %v2138, 0
      %2154 = vmatprep.subr.bf16.mxu0 0
      %2155 = vmatpush1.bf16.msra.mxu0 %v2152
      %2156 = vmatprep.subr.bf16.mxu0 0
      %2157 = vmatpush1.bf16.msra.mxu0 0
      %2158 = vmatprep.subr.bf16.mxu0 0
      %2159 = vmatpush1.bf16.msra.mxu0 0
      %2160 = vmatprep.subr.bf16.mxu0 0
      %2161 = vmatpush1.bf16.msra.mxu0 0
      %2162 = vmatprep.subr.bf16.mxu0 0
      %2163 = vmatpush1.bf16.msra.mxu0 0
      %2164 = vmatprep.subr.bf16.mxu0 0
      %2165 = vmatpush1.bf16.msra.mxu0 0
      %2166 = vmatprep.subr.bf16.mxu0 0
      %2167 = vmatpush1.bf16.msra.mxu0 0
      %2168 = vmatprep.subr.bf16.mxu0 0
      %2169 = vmatpush1.bf16.msra.mxu0 0
      %2170 = vmatprep.subr.bf16.mxu0 0
      %2171 = vmatpush1.bf16.msra.mxu0 0
      %2172 = vmatprep.subr.bf16.mxu0 0
      %2173 = vmatpush1.bf16.msra.mxu0 0
      %2174 = vmatprep.subr.bf16.mxu0 0
      %2175 = vmatpush1.bf16.msra.mxu0 0
      %2176 = vmatprep.subr.bf16.mxu0 0
      %2177 = vmatpush1.bf16.msra.mxu0 0
      %2178 = vmatprep.subr.bf16.mxu0 0
      %2179 = vmatpush1.bf16.msra.mxu0 0
      %2180 = vmatprep.subr.bf16.mxu0 0
      %2181 = vmatpush1.bf16.msra.mxu0 0
      %2182 = vmatprep.subr.bf16.mxu0 0
      %2183 = vmatpush1.bf16.msra.mxu0 0
      %2184 = vmatprep.subr.bf16.mxu0 0
      %2185 = vmatpush1.bf16.msra.mxu0 0
      %2186 = vmatprep.mubr.bf16.mxu0 0
      %2187 = vmatmul.mubr.bf16.gmra.mrb[0].mxu0 %v2140
      %v2188 = vpop.f32.mrb[0].mxu0
      %v2189 = vadd.f32 0.0, %v2188
      %v2190 = vpop.f32.mrb[0].mxu0
      %v2191 = vpop.f32.mrb[0].mxu0
      %v2192 = vadd.f32 0.0, %v2191
      %v2193 = vpop.f32.mrb[0].mxu0
      %2194 = vmatprep.mubr.bf16.mxu0 0
      %2195 = vmatmul.mubr.bf16.gmra.mrb[0].mxu0 %v2143
      %v2196 = vpop.f32.mrb[0].mxu0
      %v2197 = vadd.f32 0.0, %v2196
      %v2198 = vpop.f32.mrb[0].mxu0
      %v2199 = vpop.f32.mrb[0].mxu0
      %v2200 = vadd.f32 0.0, %v2199
      %v2201 = vpop.f32.mrb[0].mxu0
      %2202 = vmatprep.mubr.bf16.mxu0 0
      %2203 = vmatmul.mubr.bf16.gmra.mrb[0].mxu0 %v2146
      %v2204 = vpop.f32.mrb[0].mxu0
      %v2205 = vadd.f32 0.0, %v2204
      %v2206 = vpop.f32.mrb[0].mxu0
      %v2207 = vpop.f32.mrb[0].mxu0
      %v2208 = vadd.f32 0.0, %v2207
      %v2209 = vpop.f32.mrb[0].mxu0
      %2210 = vmatprep.mubr.bf16.mxu0 0
      %2211 = vmatmul.mubr.bf16.gmra.mrb[0].mxu0 %v2149
      %v2212 = vpop.f32.mrb[0].mxu0
      %v2213 = vadd.f32 0.0, %v2212
      %v2214 = vpop.f32.mrb[0].mxu0
      %v2215 = vpop.f32.mrb[0].mxu0
      %v2216 = vadd.f32 0.0, %v2215
      %v2217 = vpop.f32.mrb[0].mxu0
      %2218 = vdwg.mxu0
      %v2219 = vadd.f32 %v2117, %v2189
      %v2220 = vadd.f32 %v2118, %v2192
      %v2221 = vadd.f32 %v2119, %v2197
      %v2222 = vadd.f32 %v2120, %v2200
      %v2223 = vadd.f32 %v2121, %v2205
      %v2224 = vadd.f32 %v2122, %v2208
      %v2225 = vadd.f32 %v2123, %v2213
      %v2226 = vadd.f32 %v2124, %v2216
      %v2227 = vld [vmem:[%s4] sm:$0x1]
      %v2229 = vlaneseq
      %v2230 = vshrl.u32 %v2229, 7
      %v2231 = vsub.s32 0, %v2230
      %v2232 = vrot.slane %v2227, %v2231
      %v2234 = vadd.f32 %v2219, %v2232
      %v2235 = vadd.f32 %v2220, %v2232
      %v2236 = vadd.f32 %v2221, %v2232
      %v2237 = vadd.f32 %v2222, %v2232
      %v2238 = vadd.f32 %v2223, %v2232
      %v2239 = vadd.f32 %v2224, %v2232
      %v2240 = vadd.f32 %v2225, %v2232
      %v2241 = vadd.f32 %v2226, %v2232
      %v2242 = vadd.f32 %v2234, %v1257
      %v2243 = vadd.f32 %v2235, %v1260
      %v2244 = vadd.f32 %v2236, %v1265
      %v2245 = vadd.f32 %v2237, %v1268
      %v2246 = vadd.f32 %v2238, %v1273
      %v2247 = vadd.f32 %v2239, %v1276
      %v2248 = vadd.f32 %v2240, %v1281
      %v2249 = vadd.f32 %v2241, %v1284
      %v2250 = vmax.f32 %v2242, 0.0
      %v2251 = vmax.f32 %v2243, 0.0
      %v2252 = vmax.f32 %v2244, 0.0
      %v2253 = vmax.f32 %v2245, 0.0
      %v2254 = vmax.f32 %v2246, 0.0
      %v2255 = vmax.f32 %v2247, 0.0
      %v2256 = vmax.f32 %v2248, 0.0
      %v2257 = vmax.f32 %v2249, 0.0
      %2258 = vst.msk [vmem:[%s278] sm:$0xff] %vm1287, %v2250
      %2259 = vst.msk [vmem:[%s278 + $0x8] sm:$0xff] %vm1287, %v2251
      %2260 = vst.msk [vmem:[%s278 + $0x10] sm:$0xff] %vm1287, %v2252
      %2261 = vst.msk [vmem:[%s278 + $0x18] sm:$0xff] %vm1287, %v2253
      %2262 = vst.msk [vmem:[%s278 + $0x20] sm:$0xff] %vm1287, %v2254
      %2263 = vst.msk [vmem:[%s278 + $0x28] sm:$0xff] %vm1287, %v2255
      %2264 = vst.msk [vmem:[%s278 + $0x30] sm:$0xff] %vm1287, %v2256
      %2265 = vst.msk [vmem:[%s278 + $0x38] sm:$0xff] %vm1287, %v2257
      %p2266 = scmp.lt.s32.totalorder %s18, 1
      %s2267 = scalar_select %p2266, %s18, 1
      %s2268 = smul.addr %s2267, 8
      %s2269 = smul.addr %s2268, 8
      %s2270 = scalar_lea.vmem %s7, %s2269
      // Predicated region
      $region49: #{residual_forward.1} parent=47 // pred_check
        %p2271 = pneg %p188
      $region50: #{residual_forward.1} parent=47 // pred_check_branch
        %2273 = sbr.rel (%p2271) target = $region52
      $region51: #{residual_forward.1} parent=47 // pred_region
        _
      $region52: #{residual_forward.1} parent=47 // pred_fallthru
        _
    $region48: #{residual_forward.1} parent=5 // pred_fallthru
      _
    %p2274 = scmp.le.s32.totalorder 2, %s13
    // Predicated region
    $region53: #{residual_forward.1} parent=5 // pred_check
      %p2275 = pneg %p2274
    $region54: #{residual_forward.1} parent=5 // pred_check_branch
      %2277 = sbr.rel (%p2275) target = $region56
    $region55: #{residual_forward.1} parent=5 // pred_region
      %s2278 = ssub.s32 %s13, 2
      // Predicated region
      $region57: #{residual_forward.1} parent=55 // pred_check
        %p2279 = pneg %p194
      $region58: #{residual_forward.1} parent=55 // pred_check_branch
        %2281 = sbr.rel (%p2279) target = $region60
      $region59: #{residual_forward.1} parent=55 // pred_region
        %p2282 = scmp.lt.s32.totalorder %s19, 1
        %s2283 = scalar_select %p2282, %s19, 1
        %s2284 = smul.addr %s2283, 8
        %s2285 = smul.addr %s2284, 8
        %s2286 = scalar_lea.vmem %s7, %s2285
      $region60: #{residual_forward.1} parent=55 // pred_fallthru
        _
    $region56: #{residual_forward.1} parent=5 // pred_fallthru
      _
  $region6: #{residual_forward.1} parent=0 // loop_footer
    %s17 = sadd.s32 1, %s13
  $region7: #{residual_forward.1} parent=0 // loop_footer_branch
    %12 = sbr.rel target = $region3
  $region8: #{residual_forward.1} parent=0 // loop_exit
    _

</llo_original>
